<compile_context>
chip_gen: v7x
topology: tpu7x:2x2x1
jax: 0.10.0
libtpu: 0.0.40
codegen_flags: <defaults>
</compile_context>

<pallas_src>
import functools

import jax
import jax.numpy as jnp
from jax.experimental import pallas as pl
from jax.experimental.pallas import tpu as pltpu


# -----------------------------------------------------------------------------
# Fused kernel: one batch element per grid step.
#   conv3x3 -> +bias -> +noise -> leaky_relu(0.2) -> instance_norm -> AdaIN
# twice, back to back, entirely in VMEM.
# -----------------------------------------------------------------------------
def _genblock_kernel(x_ref,     # (1, Cin, HW)   unpadded input, lane-dense pixels
                     nz_ref,    # (1, 2, HW)     [noise1, noise2]
                     sb_ref,    # (1, Cout, 4)   [s1, b1, s2, b2] AdaIN per-batch
                     msk_ref,   # (2, HW)        [mask_l (kx=0), mask_r (kx=2)]
                     w1_ref,    # (9, Cout, Cin) conv1 weights, bf16, tap = ky*3+kx
                     w2_ref,    # (9, Cout, Cout) conv2 weights, bf16
                     cbn_ref,   # (Cout, 4)      [conv1_b, noise1_w, conv2_b, noise2_w]
                     out_ref,   # (1, Cout, HW)
                     xpad_ref,  # scratch (Cmax, HW + 2F) f32 padded activation
                     *, W, F, Cin, Cout):
    HW = out_ref.shape[2]
    L = HW + 2 * F
    Cmax = xpad_ref.shape[0]

    # Zero the flat pad regions (megacore-safe: done every step, cheap stores).
    xpad_ref[:, 0:F] = jnp.zeros((Cmax, F), jnp.float32)
    xpad_ref[:, F + HW:L] = jnp.zeros((Cmax, F), jnp.float32)

    mask_l = msk_ref[0:1, :]   # (1, HW) zero where output x == 0  (kx = 0 taps)
    mask_r = msk_ref[1:2, :]   # (1, HW) zero where output x == W-1 (kx = 2 taps)

    def stage(C, w_ref, cb, nw, noise, sc, bi):
        # Start the f32 accumulator with conv bias + noise injection.
        acc = cb + nw * noise                                  # (Cout, HW)
        # 3x3 conv as 9 per-tap MXU matmuls (bf16 operands, f32 accumulation).
        for ky in range(3):
            for kx in range(3):
                tap = ky * 3 + kx
                s = F + (ky - 1) * W + (kx - 1)
                t = xpad_ref[0:C, s:s + HW]                    # (C, HW) f32
                if kx == 0:
                    t = t * mask_l                             # kill wrapped left column
                elif kx == 2:
                    t = t * mask_r                             # kill wrapped right column
                acc = acc + jnp.dot(w_ref[tap],                # (Cout, C) bf16
                                    t.astype(jnp.bfloat16),    # (C, HW)  bf16
                                    preferred_element_type=jnp.float32)
        acc = jnp.maximum(acc, 0.2 * acc)                      # LeakyReLU(0.2)
        # InstanceNorm2d (no affine, eps=1e-5, biased var), single-pass stats.
        m = jnp.mean(acc, axis=1, keepdims=True)               # (Cout, 1)
        v = jnp.mean(acc * acc, axis=1, keepdims=True) - m * m
        v = jnp.maximum(v, 0.0)                                # guard cancellation
        xn = (acc - m) * jax.lax.rsqrt(v + 1e-5)
        return sc * xn + bi                                    # AdaIN

    cb1 = cbn_ref[:, 0:1]
    nw1 = cbn_ref[:, 1:2]
    cb2 = cbn_ref[:, 2:3]
    nw2 = cbn_ref[:, 3:4]
    s1 = sb_ref[0, :, 0:1]
    b1 = sb_ref[0, :, 1:2]
    s2 = sb_ref[0, :, 2:3]
    b2 = sb_ref[0, :, 3:4]
    n1 = nz_ref[0, 0:1, :]
    n2 = nz_ref[0, 1:2, :]

    # ---- stage 1 ----
    xpad_ref[0:Cin, F:F + HW] = x_ref[0]
    h1 = stage(Cin, w1_ref, cb1, nw1, n1, s1, b1)

    # ---- stage 2 ---- (h1 never leaves VMEM)
    xpad_ref[0:Cout, F:F + HW] = h1
    out_ref[0] = stage(Cout, w2_ref, cb2, nw2, n2, s2, b2)


# -----------------------------------------------------------------------------
# Wrapper
# -----------------------------------------------------------------------------
def genblock_forward(x_nchw, w, params, noise1_nchw, noise2_nchw):
    """GenBlock.forward. x: (B, Cin, H, W), w: (B, Wdim) -> (B, Cout, H, W)."""
    B, Cin, H, Wd = x_nchw.shape
    Cout = params["conv1_w"].shape[0]
    assert Wd >= 2, "degenerate W=1 would zero all horizontal taps"
    HW = H * Wd
    # Front/back flat padding: lane-aligned and >= W+1 (covers row -1 / row H
    # plus the one-element horizontal spill of the corner taps).
    F = 128 * ((Wd + 1 + 127) // 128)
    L = HW + 2 * F
    Cmax = max(Cin, Cout)

    # Unpadded inputs (no HBM pad pass, no 9x im2col expansion, no transposes).
    x = x_nchw.reshape(B, Cin, HW)
    nz = jnp.concatenate([noise1_nchw.reshape(B, 1, HW),
                          noise2_nchw.reshape(B, 1, HW)], axis=1)     # (B, 2, HW)

    # Lane masks for the horizontal boundary taps.
    col = jnp.arange(HW, dtype=jnp.int32) % Wd
    msk = jnp.stack([(col != 0).astype(jnp.float32),
                     (col != Wd - 1).astype(jnp.float32)], axis=0)    # (2, HW)

    def conv_w_taps(cw):   # OIHW (Cout,Cin,3,3) -> (9, Cout, Cin) bf16, tap = ky*3+kx
        co, ci, _, _ = cw.shape
        return jnp.transpose(cw, (2, 3, 0, 1)).reshape(9, co, ci).astype(jnp.bfloat16)

    w1 = conv_w_taps(params["conv1_w"])
    w2 = conv_w_taps(params["conv2_w"])
    cbn = jnp.stack([params["conv1_b"], params["noise1_w"],
                     params["conv2_b"], params["noise2_w"]], axis=1)  # (Cout, 4)

    # AdaIN style Linears hoisted out of the kernel: one batched matmul each.
    s1 = w @ params["scale1_w"].T + params["scale1_b"]
    b1 = w @ params["bias1_w"].T + params["bias1_b"]
    s2 = w @ params["scale2_w"].T + params["scale2_b"]
    b2 = w @ params["bias2_w"].T + params["bias2_b"]
    sb = jnp.stack([s1, b1, s2, b2], axis=2)                          # (B, Cout, 4)

    kernel = functools.partial(_genblock_kernel, W=Wd, F=F, Cin=Cin, Cout=Cout)

    flops = 2 * B * HW * 9 * (Cin + Cout) * Cout
    bytes_accessed = (4 * B * (Cin * HW + 2 * HW + 4 * Cout + Cout * HW)
                      + 2 * 9 * Cout * (Cin + Cout)
                      + 4 * (2 * HW + 4 * Cout))

    out = pl.pallas_call(
        kernel,
        out_shape=jax.ShapeDtypeStruct((B, Cout, HW), jnp.float32),
        grid=(B,),
        in_specs=[
            pl.BlockSpec((1, Cin, HW), lambda b: (b, 0, 0)),
            pl.BlockSpec((1, 2, HW), lambda b: (b, 0, 0)),
            pl.BlockSpec((1, Cout, 4), lambda b: (b, 0, 0)),
            pl.BlockSpec((2, HW), lambda b: (0, 0)),
            pl.BlockSpec((9, Cout, Cin), lambda b: (0, 0, 0)),
            pl.BlockSpec((9, Cout, Cout), lambda b: (0, 0, 0)),
            pl.BlockSpec((Cout, 4), lambda b: (0, 0)),
        ],
        out_specs=pl.BlockSpec((1, Cout, HW), lambda b: (b, 0, 0)),
        scratch_shapes=[pltpu.VMEM((Cmax, L), jnp.float32)],
        compiler_params=pltpu.CompilerParams(
            # grid=(B,) parallel steps feed both TensorCores on v7x when B>=2.
            dimension_semantics=("parallel",),
            # 64 MiB: fits v7x's physical budget; v5e/v6e (128 MiB) have
            # headroom to raise this for larger fused C*HW.
            vmem_limit_bytes=64 * 1024 * 1024),
        cost_estimate=pl.CostEstimate(flops=flops, transcendentals=2 * B * Cout,
                                      bytes_accessed=bytes_accessed),
    )(x, nz, sb, msk, w1, w2, cbn)

    return out.reshape(B, Cout, H, Wd)


# -----------------------------------------------------------------------------
# Pure-JAX reference (mirrors the PyTorch module exactly, NCHW, f32).
# -----------------------------------------------------------------------------
def _ref_forward(x, w, p, n1, n2):
    def conv(x, wt, b):
        y = jax.lax.conv_general_dilated(
            x, wt, window_strides=(1, 1), padding=((1, 1), (1, 1)),
            dimension_numbers=("NCHW", "OIHW", "NCHW"))
        return y + b[None, :, None, None]

    def noise(x, nw, n):
        return x + nw[None, :, None, None] * n

    def lrelu(x):
        return jnp.where(x >= 0, x, 0.2 * x)

    def adain(x, w, sw, sb, bw, bb):
        m = x.mean(axis=(2, 3), keepdims=True)
        v = ((x - m) ** 2).mean(axis=(2, 3), keepdims=True)
        xn = (x - m) / jnp.sqrt(v + 1e-5)
        sc = (w @ sw.T + sb)[:, :, None, None]
        bi = (w @ bw.T + bb)[:, :, None, None]
        return sc * xn + bi

    h = conv(x, p["conv1_w"], p["conv1_b"])
    h = noise(h, p["noise1_w"], n1)
    h = lrelu(h)
    h = adain(h, w, p["scale1_w"], p["scale1_b"], p["bias1_w"], p["bias1_b"])
    h = conv(h, p["conv2_w"], p["conv2_b"])
    h = noise(h, p["noise2_w"], n2)
    h = lrelu(h)
    h = adain(h, w, p["scale2_w"], p["scale2_b"], p["bias2_w"], p["bias2_b"])
    return h


# -----------------------------------------------------------------------------
if __name__ == "__main__":
    B, Cin, Cout, H, W, Wdim = 2, 4, 8, 16, 16, 16

    key = jax.random.PRNGKey(0)
    ks = jax.random.split(key, 20)

    def rnd(k, shape, scale=0.1):
        return scale * jax.random.normal(k, shape, dtype=jnp.float32)

    params = {
        "conv1_w": rnd(ks[0], (Cout, Cin, 3, 3)),
        "conv1_b": rnd(ks[1], (Cout,)),
        "conv2_w": rnd(ks[2], (Cout, Cout, 3, 3)),
        "conv2_b": rnd(ks[3], (Cout,)),
        # NoiseInjection weights are zeros in __init__; use nonzero values here
        # so the code path is exercised (formula is identical either way).
        "noise1_w": rnd(ks[4], (Cout,)),
        "noise2_w": rnd(ks[5], (Cout,)),
        "scale1_w": rnd(ks[6], (Cout, Wdim)),
        "scale1_b": rnd(ks[7], (Cout,)),
        "bias1_w": rnd(ks[8], (Cout, Wdim)),
        "bias1_b": rnd(ks[9], (Cout,)),
        "scale2_w": rnd(ks[10], (Cout, Wdim)),
        "scale2_b": rnd(ks[11], (Cout,)),
        "bias2_w": rnd(ks[12], (Cout, Wdim)),
        "bias2_b": rnd(ks[13], (Cout,)),
    }

    x = jax.random.normal(ks[14], (B, Cin, H, W), dtype=jnp.float32)
    w = jax.random.normal(ks[15], (B, Wdim), dtype=jnp.float32)
    # forward() draws randn noise when noise=None; generate it deterministically here.
    noise1 = jax.random.normal(ks[16], (B, 1, H, W), dtype=jnp.float32)
    noise2 = jax.random.normal(ks[17], (B, 1, H, W), dtype=jnp.float32)

    out = jax.jit(genblock_forward)(x, w, params, noise1, noise2)
    out = jax.block_until_ready(out)

    ref = _ref_forward(x, w, params, noise1, noise2)
    assert out.shape == (B, Cout, H, W)
    # bf16 MXU operands (f32 accumulation / stats): slightly looser tolerance
    # than the f32-everywhere version; still far below any structural-bug error.
    max_err = float(jnp.max(jnp.abs(out - ref)))
    rel_err = float(jnp.linalg.norm(out - ref) / jnp.linalg.norm(ref))
    assert max_err < 5e-2 and rel_err < 2e-2, (max_err, rel_err)

    print("KERNEL_OK")
</pallas_src>

<mosaic_0001>
module attributes {stable_mosaic.version = 11 : i64} {
  func.func @_genblock_kernel(%arg0: i32, %arg1: memref<1x4x256xf32, #tpu.memory_space<vmem>>, %arg2: memref<1x2x256xf32, #tpu.memory_space<vmem>>, %arg3: memref<1x8x4xf32, #tpu.memory_space<vmem>>, %arg4: memref<2x256xf32, #tpu.memory_space<vmem>>, %arg5: memref<9x8x4xbf16, #tpu.memory_space<vmem>>, %arg6: memref<9x8x8xbf16, #tpu.memory_space<vmem>>, %arg7: memref<8x4xf32, #tpu.memory_space<vmem>>, %arg8: memref<1x8x256xf32, #tpu.memory_space<vmem>>, %arg9: memref<8x512xf32, #tpu.memory_space<vmem>>) attributes {dimension_semantics = [#tpu.dimension_semantics<parallel>], iteration_bounds = array<i64: 2>, scalar_prefetch = 0 : i64, scratch_operands = 1 : i64, tpu.core_type = #tpu.core_type<tc>, window_params = [{transform_indices = @transform_0, window_bounds = array<i64: 1, 4, 256>}, {transform_indices = @transform_1, window_bounds = array<i64: 1, 2, 256>}, {transform_indices = @transform_2, window_bounds = array<i64: 1, 8, 4>}, {pipeline_mode = #tpu.pipeline_mode<synchronous>, transform_indices = @transform_3, window_bounds = array<i64: 2, 256>}, {pipeline_mode = #tpu.pipeline_mode<synchronous>, transform_indices = @transform_4, window_bounds = array<i64: 9, 8, 4>}, {pipeline_mode = #tpu.pipeline_mode<synchronous>, transform_indices = @transform_5, window_bounds = array<i64: 9, 8, 8>}, {pipeline_mode = #tpu.pipeline_mode<synchronous>, transform_indices = @transform_6, window_bounds = array<i64: 8, 4>}, {transform_indices = @transform_7, window_bounds = array<i64: 1, 8, 256>}]} {
    %cst = arith.constant 0.000000e+00 : f32
    %0 = vector.broadcast %cst : f32 to vector<8x128xf32>
    %c0 = arith.constant 0 : index
    %c0_0 = arith.constant 0 : index
    %1 = vector.load %arg9[%c0, %c0_0] : memref<8x512xf32, #tpu.memory_space<vmem>>, vector<8x128xf32>
    tpu.vector_store %arg9[%c0, %c0_0], %0 {strides = array<i32>} : memref<8x512xf32, #tpu.memory_space<vmem>>, vector<8x128xf32>,
    %cst_1 = arith.constant 0.000000e+00 : f32
    %2 = vector.broadcast %cst_1 : f32 to vector<8x128xf32>
    %c0_2 = arith.constant 0 : index
    %c384 = arith.constant 384 : index
    %3 = vector.load %arg9[%c0_2, %c384] : memref<8x512xf32, #tpu.memory_space<vmem>>, vector<8x128xf32>
    tpu.vector_store %arg9[%c0_2, %c384], %2 {strides = array<i32>} : memref<8x512xf32, #tpu.memory_space<vmem>>, vector<8x128xf32>,
    %c0_3 = arith.constant 0 : index
    %c0_4 = arith.constant 0 : index
    %4 = vector.load %arg4[%c0_3, %c0_4] : memref<2x256xf32, #tpu.memory_space<vmem>>, vector<1x256xf32>
    %c1 = arith.constant 1 : index
    %c0_5 = arith.constant 0 : index
    %5 = vector.load %arg4[%c1, %c0_5] : memref<2x256xf32, #tpu.memory_space<vmem>>, vector<1x256xf32>
    %c0_6 = arith.constant 0 : index
    %c0_7 = arith.constant 0 : index
    %6 = vector.load %arg7[%c0_6, %c0_7] : memref<8x4xf32, #tpu.memory_space<vmem>>, vector<8x1xf32>
    %c0_8 = arith.constant 0 : index
    %c1_9 = arith.constant 1 : index
    %7 = vector.load %arg7[%c0_8, %c1_9] : memref<8x4xf32, #tpu.memory_space<vmem>>, vector<8x1xf32>
    %c0_10 = arith.constant 0 : index
    %c2 = arith.constant 2 : index
    %8 = vector.load %arg7[%c0_10, %c2] : memref<8x4xf32, #tpu.memory_space<vmem>>, vector<8x1xf32>
    %c0_11 = arith.constant 0 : index
    %c3 = arith.constant 3 : index
    %9 = vector.load %arg7[%c0_11, %c3] : memref<8x4xf32, #tpu.memory_space<vmem>>, vector<8x1xf32>
    %c0_12 = arith.constant 0 : index
    %c0_13 = arith.constant 0 : index
    %c0_14 = arith.constant 0 : index
    %10 = vector.load %arg3[%c0_12, %c0_13, %c0_14] : memref<1x8x4xf32, #tpu.memory_space<vmem>>, vector<1x8x1xf32>
    %11 = vector.shape_cast %10 : vector<1x8x1xf32> to vector<8x1xf32>
    %c0_15 = arith.constant 0 : index
    %c0_16 = arith.constant 0 : index
    %c1_17 = arith.constant 1 : index
    %12 = vector.load %arg3[%c0_15, %c0_16, %c1_17] : memref<1x8x4xf32, #tpu.memory_space<vmem>>, vector<1x8x1xf32>
    %13 = vector.shape_cast %12 : vector<1x8x1xf32> to vector<8x1xf32>
    %c0_18 = arith.constant 0 : index
    %c0_19 = arith.constant 0 : index
    %c2_20 = arith.constant 2 : index
    %14 = vector.load %arg3[%c0_18, %c0_19, %c2_20] : memref<1x8x4xf32, #tpu.memory_space<vmem>>, vector<1x8x1xf32>
    %15 = vector.shape_cast %14 : vector<1x8x1xf32> to vector<8x1xf32>
    %c0_21 = arith.constant 0 : index
    %c0_22 = arith.constant 0 : index
    %c3_23 = arith.constant 3 : index
    %16 = vector.load %arg3[%c0_21, %c0_22, %c3_23] : memref<1x8x4xf32, #tpu.memory_space<vmem>>, vector<1x8x1xf32>
    %17 = vector.shape_cast %16 : vector<1x8x1xf32> to vector<8x1xf32>
    %c0_24 = arith.constant 0 : index
    %c0_25 = arith.constant 0 : index
    %c0_26 = arith.constant 0 : index
    %18 = vector.load %arg2[%c0_24, %c0_25, %c0_26] : memref<1x2x256xf32, #tpu.memory_space<vmem>>, vector<1x1x256xf32>
    %19 = vector.shape_cast %18 : vector<1x1x256xf32> to vector<1x256xf32>
    %c0_27 = arith.constant 0 : index
    %c1_28 = arith.constant 1 : index
    %c0_29 = arith.constant 0 : index
    %20 = vector.load %arg2[%c0_27, %c1_28, %c0_29] : memref<1x2x256xf32, #tpu.memory_space<vmem>>, vector<1x1x256xf32>
    %21 = vector.shape_cast %20 : vector<1x1x256xf32> to vector<1x256xf32>
    %c0_30 = arith.constant 0 : index
    %c0_31 = arith.constant 0 : index
    %c0_32 = arith.constant 0 : index
    %22 = vector.load %arg1[%c0_30, %c0_31, %c0_32] : memref<1x4x256xf32, #tpu.memory_space<vmem>>, vector<1x4x256xf32>
    %23 = vector.shape_cast %22 : vector<1x4x256xf32> to vector<4x256xf32>
    %c0_33 = arith.constant 0 : index
    %c128 = arith.constant 128 : index
    %24 = vector.load %arg9[%c0_33, %c128] : memref<8x512xf32, #tpu.memory_space<vmem>>, vector<4x256xf32>
    tpu.vector_store %arg9[%c0_33, %c128], %23 {strides = array<i32>} : memref<8x512xf32, #tpu.memory_space<vmem>>, vector<4x256xf32>,
    %25 = vector.broadcast %7 : vector<8x1xf32> to vector<8x256xf32>
    %26 = vector.broadcast %19 : vector<1x256xf32> to vector<8x256xf32>
    %27 = arith.mulf %25, %26 : vector<8x256xf32>
    %28 = vector.broadcast %6 : vector<8x1xf32> to vector<8x256xf32>
    %29 = arith.addf %28, %27 : vector<8x256xf32>
    %c0_34 = arith.constant 0 : index
    %c111 = arith.constant 111 : index
    %30 = vector.load %arg9[%c0_34, %c111] : memref<8x512xf32, #tpu.memory_space<vmem>>, vector<4x256xf32>
    %31 = vector.broadcast %4 : vector<1x256xf32> to vector<4x256xf32>
    %32 = arith.mulf %30, %31 : vector<4x256xf32>
    %c0_35 = arith.constant 0 : index
    %c0_36 = arith.constant 0 : index
    %c0_37 = arith.constant 0 : index
    %33 = vector.load %arg5[%c0_35, %c0_36, %c0_37] : memref<9x8x4xbf16, #tpu.memory_space<vmem>>, vector<1x8x4xbf16>
    %34 = vector.shape_cast %33 : vector<1x8x4xbf16> to vector<8x4xbf16>
    %35 = arith.truncf %32 : vector<4x256xf32> to vector<4x256xbf16>
    %cst_38 = arith.constant dense<0.000000e+00> : vector<8x256xf32>
    %36 = tpu.matmul %34, %35, %cst_38 {dimension_numbers = #tpu.dot_dimension_numbers<[1], [0], [0], [1], [0, 0, 1, 1], [], []>} : vector<8x4xbf16>, vector<4x256xbf16>, vector<8x256xf32> -> vector<8x256xf32>
    %37 = arith.addf %29, %36 : vector<8x256xf32>
    %c0_39 = arith.constant 0 : index
    %c112 = arith.constant 112 : index
    %38 = vector.load %arg9[%c0_39, %c112] : memref<8x512xf32, #tpu.memory_space<vmem>>, vector<4x256xf32>
    %c1_40 = arith.constant 1 : index
    %c0_41 = arith.constant 0 : index
    %c0_42 = arith.constant 0 : index
    %39 = vector.load %arg5[%c1_40, %c0_41, %c0_42] : memref<9x8x4xbf16, #tpu.memory_space<vmem>>, vector<1x8x4xbf16>
    %40 = vector.shape_cast %39 : vector<1x8x4xbf16> to vector<8x4xbf16>
    %41 = arith.truncf %38 : vector<4x256xf32> to vector<4x256xbf16>
    %cst_43 = arith.constant dense<0.000000e+00> : vector<8x256xf32>
    %42 = tpu.matmul %40, %41, %cst_43 {dimension_numbers = #tpu.dot_dimension_numbers<[1], [0], [0], [1], [0, 0, 1, 1], [], []>} : vector<8x4xbf16>, vector<4x256xbf16>, vector<8x256xf32> -> vector<8x256xf32>
    %43 = arith.addf %37, %42 : vector<8x256xf32>
    %c0_44 = arith.constant 0 : index
    %c113 = arith.constant 113 : index
    %44 = vector.load %arg9[%c0_44, %c113] : memref<8x512xf32, #tpu.memory_space<vmem>>, vector<4x256xf32>
    %45 = vector.broadcast %5 : vector<1x256xf32> to vector<4x256xf32>
    %46 = arith.mulf %44, %45 : vector<4x256xf32>
    %c2_45 = arith.constant 2 : index
    %c0_46 = arith.constant 0 : index
    %c0_47 = arith.constant 0 : index
    %47 = vector.load %arg5[%c2_45, %c0_46, %c0_47] : memref<9x8x4xbf16, #tpu.memory_space<vmem>>, vector<1x8x4xbf16>
    %48 = vector.shape_cast %47 : vector<1x8x4xbf16> to vector<8x4xbf16>
    %49 = arith.truncf %46 : vector<4x256xf32> to vector<4x256xbf16>
    %cst_48 = arith.constant dense<0.000000e+00> : vector<8x256xf32>
    %50 = tpu.matmul %48, %49, %cst_48 {dimension_numbers = #tpu.dot_dimension_numbers<[1], [0], [0], [1], [0, 0, 1, 1], [], []>} : vector<8x4xbf16>, vector<4x256xbf16>, vector<8x256xf32> -> vector<8x256xf32>
    %51 = arith.addf %43, %50 : vector<8x256xf32>
    %c0_49 = arith.constant 0 : index
    %c127 = arith.constant 127 : index
    %52 = vector.load %arg9[%c0_49, %c127] : memref<8x512xf32, #tpu.memory_space<vmem>>, vector<4x256xf32>
    %53 = vector.broadcast %4 : vector<1x256xf32> to vector<4x256xf32>
    %54 = arith.mulf %52, %53 : vector<4x256xf32>
    %c3_50 = arith.constant 3 : index
    %c0_51 = arith.constant 0 : index
    %c0_52 = arith.constant 0 : index
    %55 = vector.load %arg5[%c3_50, %c0_51, %c0_52] : memref<9x8x4xbf16, #tpu.memory_space<vmem>>, vector<1x8x4xbf16>
    %56 = vector.shape_cast %55 : vector<1x8x4xbf16> to vector<8x4xbf16>
    %57 = arith.truncf %54 : vector<4x256xf32> to vector<4x256xbf16>
    %cst_53 = arith.constant dense<0.000000e+00> : vector<8x256xf32>
    %58 = tpu.matmul %56, %57, %cst_53 {dimension_numbers = #tpu.dot_dimension_numbers<[1], [0], [0], [1], [0, 0, 1, 1], [], []>} : vector<8x4xbf16>, vector<4x256xbf16>, vector<8x256xf32> -> vector<8x256xf32>
    %59 = arith.addf %51, %58 : vector<8x256xf32>
    %c0_54 = arith.constant 0 : index
    %c128_55 = arith.constant 128 : index
    %60 = vector.load %arg9[%c0_54, %c128_55] : memref<8x512xf32, #tpu.memory_space<vmem>>, vector<4x256xf32>
    %c4 = arith.constant 4 : index
    %c0_56 = arith.constant 0 : index
    %c0_57 = arith.constant 0 : index
    %61 = vector.load %arg5[%c4, %c0_56, %c0_57] : memref<9x8x4xbf16, #tpu.memory_space<vmem>>, vector<1x8x4xbf16>
    %62 = vector.shape_cast %61 : vector<1x8x4xbf16> to vector<8x4xbf16>
    %63 = arith.truncf %60 : vector<4x256xf32> to vector<4x256xbf16>
    %cst_58 = arith.constant dense<0.000000e+00> : vector<8x256xf32>
    %64 = tpu.matmul %62, %63, %cst_58 {dimension_numbers = #tpu.dot_dimension_numbers<[1], [0], [0], [1], [0, 0, 1, 1], [], []>} : vector<8x4xbf16>, vector<4x256xbf16>, vector<8x256xf32> -> vector<8x256xf32>
    %65 = arith.addf %59, %64 : vector<8x256xf32>
    %c0_59 = arith.constant 0 : index
    %c129 = arith.constant 129 : index
    %66 = vector.load %arg9[%c0_59, %c129] : memref<8x512xf32, #tpu.memory_space<vmem>>, vector<4x256xf32>
    %67 = vector.broadcast %5 : vector<1x256xf32> to vector<4x256xf32>
    %68 = arith.mulf %66, %67 : vector<4x256xf32>
    %c5 = arith.constant 5 : index
    %c0_60 = arith.constant 0 : index
    %c0_61 = arith.constant 0 : index
    %69 = vector.load %arg5[%c5, %c0_60, %c0_61] : memref<9x8x4xbf16, #tpu.memory_space<vmem>>, vector<1x8x4xbf16>
    %70 = vector.shape_cast %69 : vector<1x8x4xbf16> to vector<8x4xbf16>
    %71 = arith.truncf %68 : vector<4x256xf32> to vector<4x256xbf16>
    %cst_62 = arith.constant dense<0.000000e+00> : vector<8x256xf32>
    %72 = tpu.matmul %70, %71, %cst_62 {dimension_numbers = #tpu.dot_dimension_numbers<[1], [0], [0], [1], [0, 0, 1, 1], [], []>} : vector<8x4xbf16>, vector<4x256xbf16>, vector<8x256xf32> -> vector<8x256xf32>
    %73 = arith.addf %65, %72 : vector<8x256xf32>
    %c0_63 = arith.constant 0 : index
    %c143 = arith.constant 143 : index
    %74 = vector.load %arg9[%c0_63, %c143] : memref<8x512xf32, #tpu.memory_space<vmem>>, vector<4x256xf32>
    %75 = vector.broadcast %4 : vector<1x256xf32> to vector<4x256xf32>
    %76 = arith.mulf %74, %75 : vector<4x256xf32>
    %c6 = arith.constant 6 : index
    %c0_64 = arith.constant 0 : index
    %c0_65 = arith.constant 0 : index
    %77 = vector.load %arg5[%c6, %c0_64, %c0_65] : memref<9x8x4xbf16, #tpu.memory_space<vmem>>, vector<1x8x4xbf16>
    %78 = vector.shape_cast %77 : vector<1x8x4xbf16> to vector<8x4xbf16>
    %79 = arith.truncf %76 : vector<4x256xf32> to vector<4x256xbf16>
    %cst_66 = arith.constant dense<0.000000e+00> : vector<8x256xf32>
    %80 = tpu.matmul %78, %79, %cst_66 {dimension_numbers = #tpu.dot_dimension_numbers<[1], [0], [0], [1], [0, 0, 1, 1], [], []>} : vector<8x4xbf16>, vector<4x256xbf16>, vector<8x256xf32> -> vector<8x256xf32>
    %81 = arith.addf %73, %80 : vector<8x256xf32>
    %c0_67 = arith.constant 0 : index
    %c144 = arith.constant 144 : index
    %82 = vector.load %arg9[%c0_67, %c144] : memref<8x512xf32, #tpu.memory_space<vmem>>, vector<4x256xf32>
    %c7 = arith.constant 7 : index
    %c0_68 = arith.constant 0 : index
    %c0_69 = arith.constant 0 : index
    %83 = vector.load %arg5[%c7, %c0_68, %c0_69] : memref<9x8x4xbf16, #tpu.memory_space<vmem>>, vector<1x8x4xbf16>
    %84 = vector.shape_cast %83 : vector<1x8x4xbf16> to vector<8x4xbf16>
    %85 = arith.truncf %82 : vector<4x256xf32> to vector<4x256xbf16>
    %cst_70 = arith.constant dense<0.000000e+00> : vector<8x256xf32>
    %86 = tpu.matmul %84, %85, %cst_70 {dimension_numbers = #tpu.dot_dimension_numbers<[1], [0], [0], [1], [0, 0, 1, 1], [], []>} : vector<8x4xbf16>, vector<4x256xbf16>, vector<8x256xf32> -> vector<8x256xf32>
    %87 = arith.addf %81, %86 : vector<8x256xf32>
    %c0_71 = arith.constant 0 : index
    %c145 = arith.constant 145 : index
    %88 = vector.load %arg9[%c0_71, %c145] : memref<8x512xf32, #tpu.memory_space<vmem>>, vector<4x256xf32>
    %89 = vector.broadcast %5 : vector<1x256xf32> to vector<4x256xf32>
    %90 = arith.mulf %88, %89 : vector<4x256xf32>
    %c8 = arith.constant 8 : index
    %c0_72 = arith.constant 0 : index
    %c0_73 = arith.constant 0 : index
    %91 = vector.load %arg5[%c8, %c0_72, %c0_73] : memref<9x8x4xbf16, #tpu.memory_space<vmem>>, vector<1x8x4xbf16>
    %92 = vector.shape_cast %91 : vector<1x8x4xbf16> to vector<8x4xbf16>
    %93 = arith.truncf %90 : vector<4x256xf32> to vector<4x256xbf16>
    %cst_74 = arith.constant dense<0.000000e+00> : vector<8x256xf32>
    %94 = tpu.matmul %92, %93, %cst_74 {dimension_numbers = #tpu.dot_dimension_numbers<[1], [0], [0], [1], [0, 0, 1, 1], [], []>} : vector<8x4xbf16>, vector<4x256xbf16>, vector<8x256xf32> -> vector<8x256xf32>
    %95 = arith.addf %87, %94 : vector<8x256xf32>
    %cst_75 = arith.constant 2.000000e-01 : f32
    %96 = vector.broadcast %cst_75 : f32 to vector<8x256xf32>
    %97 = arith.mulf %96, %95 : vector<8x256xf32>
    %98 = arith.maximumf %95, %97 : vector<8x256xf32>
    %cst_76 = arith.constant dense<0.000000e+00> : vector<8xf32>
    %99 = vector.multi_reduction <add>, %98, %cst_76 [1] : vector<8x256xf32> to vector<8xf32>
    %100 = vector.shape_cast %99 : vector<8xf32> to vector<8x1xf32>
    %cst_77 = arith.constant 2.560000e+02 : f32
    %101 = vector.broadcast %cst_77 : f32 to vector<8x1xf32>
    %102 = arith.divf %100, %101 : vector<8x1xf32>
    %103 = arith.mulf %98, %98 : vector<8x256xf32>
    %cst_78 = arith.constant dense<0.000000e+00> : vector<8xf32>
    %104 = vector.multi_reduction <add>, %103, %cst_78 [1] : vector<8x256xf32> to vector<8xf32>
    %105 = vector.shape_cast %104 : vector<8xf32> to vector<8x1xf32>
    %cst_79 = arith.constant 2.560000e+02 : f32
    %106 = vector.broadcast %cst_79 : f32 to vector<8x1xf32>
    %107 = arith.divf %105, %106 : vector<8x1xf32>
    %108 = arith.mulf %102, %102 : vector<8x1xf32>
    %109 = arith.subf %107, %108 : vector<8x1xf32>
    %cst_80 = arith.constant 0.000000e+00 : f32
    %110 = vector.broadcast %cst_80 : f32 to vector<8x1xf32>
    %111 = arith.maximumf %109, %110 : vector<8x1xf32>
    %112 = vector.broadcast %102 : vector<8x1xf32> to vector<8x256xf32>
    %113 = arith.subf %98, %112 : vector<8x256xf32>
    %cst_81 = arith.constant 9.99999974E-6 : f32
    %114 = vector.broadcast %cst_81 : f32 to vector<8x1xf32>
    %115 = arith.addf %111, %114 : vector<8x1xf32>
    %116 = math.rsqrt %115 : vector<8x1xf32>
    %117 = vector.broadcast %116 : vector<8x1xf32> to vector<8x256xf32>
    %118 = arith.mulf %113, %117 : vector<8x256xf32>
    %119 = vector.broadcast %11 : vector<8x1xf32> to vector<8x256xf32>
    %120 = arith.mulf %119, %118 : vector<8x256xf32>
    %121 = vector.broadcast %13 : vector<8x1xf32> to vector<8x256xf32>
    %122 = arith.addf %120, %121 : vector<8x256xf32>
    %c0_82 = arith.constant 0 : index
    %c128_83 = arith.constant 128 : index
    %123 = vector.load %arg9[%c0_82, %c128_83] : memref<8x512xf32, #tpu.memory_space<vmem>>, vector<8x256xf32>
    tpu.vector_store %arg9[%c0_82, %c128_83], %122 {strides = array<i32>} : memref<8x512xf32, #tpu.memory_space<vmem>>, vector<8x256xf32>,
    %124 = vector.broadcast %9 : vector<8x1xf32> to vector<8x256xf32>
    %125 = vector.broadcast %21 : vector<1x256xf32> to vector<8x256xf32>
    %126 = arith.mulf %124, %125 : vector<8x256xf32>
    %127 = vector.broadcast %8 : vector<8x1xf32> to vector<8x256xf32>
    %128 = arith.addf %127, %126 : vector<8x256xf32>
    %c0_84 = arith.constant 0 : index
    %c111_85 = arith.constant 111 : index
    %129 = vector.load %arg9[%c0_84, %c111_85] : memref<8x512xf32, #tpu.memory_space<vmem>>, vector<8x256xf32>
    %130 = vector.broadcast %4 : vector<1x256xf32> to vector<8x256xf32>
    %131 = arith.mulf %129, %130 : vector<8x256xf32>
    %c0_86 = arith.constant 0 : index
    %c0_87 = arith.constant 0 : index
    %c0_88 = arith.constant 0 : index
    %132 = vector.load %arg6[%c0_86, %c0_87, %c0_88] : memref<9x8x8xbf16, #tpu.memory_space<vmem>>, vector<1x8x8xbf16>
    %133 = vector.shape_cast %132 : vector<1x8x8xbf16> to vector<8x8xbf16>
    %134 = arith.truncf %131 : vector<8x256xf32> to vector<8x256xbf16>
    %cst_89 = arith.constant dense<0.000000e+00> : vector<8x256xf32>
    %135 = tpu.matmul %133, %134, %cst_89 {dimension_numbers = #tpu.dot_dimension_numbers<[1], [0], [0], [1], [0, 0, 1, 1], [], []>} : vector<8x8xbf16>, vector<8x256xbf16>, vector<8x256xf32> -> vector<8x256xf32>
    %136 = arith.addf %128, %135 : vector<8x256xf32>
    %c0_90 = arith.constant 0 : index
    %c112_91 = arith.constant 112 : index
    %137 = vector.load %arg9[%c0_90, %c112_91] : memref<8x512xf32, #tpu.memory_space<vmem>>, vector<8x256xf32>
    %c1_92 = arith.constant 1 : index
    %c0_93 = arith.constant 0 : index
    %c0_94 = arith.constant 0 : index
    %138 = vector.load %arg6[%c1_92, %c0_93, %c0_94] : memref<9x8x8xbf16, #tpu.memory_space<vmem>>, vector<1x8x8xbf16>
    %139 = vector.shape_cast %138 : vector<1x8x8xbf16> to vector<8x8xbf16>
    %140 = arith.truncf %137 : vector<8x256xf32> to vector<8x256xbf16>
    %cst_95 = arith.constant dense<0.000000e+00> : vector<8x256xf32>
    %141 = tpu.matmul %139, %140, %cst_95 {dimension_numbers = #tpu.dot_dimension_numbers<[1], [0], [0], [1], [0, 0, 1, 1], [], []>} : vector<8x8xbf16>, vector<8x256xbf16>, vector<8x256xf32> -> vector<8x256xf32>
    %142 = arith.addf %136, %141 : vector<8x256xf32>
    %c0_96 = arith.constant 0 : index
    %c113_97 = arith.constant 113 : index
    %143 = vector.load %arg9[%c0_96, %c113_97] : memref<8x512xf32, #tpu.memory_space<vmem>>, vector<8x256xf32>
    %144 = vector.broadcast %5 : vector<1x256xf32> to vector<8x256xf32>
    %145 = arith.mulf %143, %144 : vector<8x256xf32>
    %c2_98 = arith.constant 2 : index
    %c0_99 = arith.constant 0 : index
    %c0_100 = arith.constant 0 : index
    %146 = vector.load %arg6[%c2_98, %c0_99, %c0_100] : memref<9x8x8xbf16, #tpu.memory_space<vmem>>, vector<1x8x8xbf16>
    %147 = vector.shape_cast %146 : vector<1x8x8xbf16> to vector<8x8xbf16>
    %148 = arith.truncf %145 : vector<8x256xf32> to vector<8x256xbf16>
    %cst_101 = arith.constant dense<0.000000e+00> : vector<8x256xf32>
    %149 = tpu.matmul %147, %148, %cst_101 {dimension_numbers = #tpu.dot_dimension_numbers<[1], [0], [0], [1], [0, 0, 1, 1], [], []>} : vector<8x8xbf16>, vector<8x256xbf16>, vector<8x256xf32> -> vector<8x256xf32>
    %150 = arith.addf %142, %149 : vector<8x256xf32>
    %c0_102 = arith.constant 0 : index
    %c127_103 = arith.constant 127 : index
    %151 = vector.load %arg9[%c0_102, %c127_103] : memref<8x512xf32, #tpu.memory_space<vmem>>, vector<8x256xf32>
    %152 = vector.broadcast %4 : vector<1x256xf32> to vector<8x256xf32>
    %153 = arith.mulf %151, %152 : vector<8x256xf32>
    %c3_104 = arith.constant 3 : index
    %c0_105 = arith.constant 0 : index
    %c0_106 = arith.constant 0 : index
    %154 = vector.load %arg6[%c3_104, %c0_105, %c0_106] : memref<9x8x8xbf16, #tpu.memory_space<vmem>>, vector<1x8x8xbf16>
    %155 = vector.shape_cast %154 : vector<1x8x8xbf16> to vector<8x8xbf16>
    %156 = arith.truncf %153 : vector<8x256xf32> to vector<8x256xbf16>
    %cst_107 = arith.constant dense<0.000000e+00> : vector<8x256xf32>
    %157 = tpu.matmul %155, %156, %cst_107 {dimension_numbers = #tpu.dot_dimension_numbers<[1], [0], [0], [1], [0, 0, 1, 1], [], []>} : vector<8x8xbf16>, vector<8x256xbf16>, vector<8x256xf32> -> vector<8x256xf32>
    %158 = arith.addf %150, %157 : vector<8x256xf32>
    %c0_108 = arith.constant 0 : index
    %c128_109 = arith.constant 128 : index
    %159 = vector.load %arg9[%c0_108, %c128_109] : memref<8x512xf32, #tpu.memory_space<vmem>>, vector<8x256xf32>
    %c4_110 = arith.constant 4 : index
    %c0_111 = arith.constant 0 : index
    %c0_112 = arith.constant 0 : index
    %160 = vector.load %arg6[%c4_110, %c0_111, %c0_112] : memref<9x8x8xbf16, #tpu.memory_space<vmem>>, vector<1x8x8xbf16>
    %161 = vector.shape_cast %160 : vector<1x8x8xbf16> to vector<8x8xbf16>
    %162 = arith.truncf %159 : vector<8x256xf32> to vector<8x256xbf16>
    %cst_113 = arith.constant dense<0.000000e+00> : vector<8x256xf32>
    %163 = tpu.matmul %161, %162, %cst_113 {dimension_numbers = #tpu.dot_dimension_numbers<[1], [0], [0], [1], [0, 0, 1, 1], [], []>} : vector<8x8xbf16>, vector<8x256xbf16>, vector<8x256xf32> -> vector<8x256xf32>
    %164 = arith.addf %158, %163 : vector<8x256xf32>
    %c0_114 = arith.constant 0 : index
    %c129_115 = arith.constant 129 : index
    %165 = vector.load %arg9[%c0_114, %c129_115] : memref<8x512xf32, #tpu.memory_space<vmem>>, vector<8x256xf32>
    %166 = vector.broadcast %5 : vector<1x256xf32> to vector<8x256xf32>
    %167 = arith.mulf %165, %166 : vector<8x256xf32>
    %c5_116 = arith.constant 5 : index
    %c0_117 = arith.constant 0 : index
    %c0_118 = arith.constant 0 : index
    %168 = vector.load %arg6[%c5_116, %c0_117, %c0_118] : memref<9x8x8xbf16, #tpu.memory_space<vmem>>, vector<1x8x8xbf16>
    %169 = vector.shape_cast %168 : vector<1x8x8xbf16> to vector<8x8xbf16>
    %170 = arith.truncf %167 : vector<8x256xf32> to vector<8x256xbf16>
    %cst_119 = arith.constant dense<0.000000e+00> : vector<8x256xf32>
    %171 = tpu.matmul %169, %170, %cst_119 {dimension_numbers = #tpu.dot_dimension_numbers<[1], [0], [0], [1], [0, 0, 1, 1], [], []>} : vector<8x8xbf16>, vector<8x256xbf16>, vector<8x256xf32> -> vector<8x256xf32>
    %172 = arith.addf %164, %171 : vector<8x256xf32>
    %c0_120 = arith.constant 0 : index
    %c143_121 = arith.constant 143 : index
    %173 = vector.load %arg9[%c0_120, %c143_121] : memref<8x512xf32, #tpu.memory_space<vmem>>, vector<8x256xf32>
    %174 = vector.broadcast %4 : vector<1x256xf32> to vector<8x256xf32>
    %175 = arith.mulf %173, %174 : vector<8x256xf32>
    %c6_122 = arith.constant 6 : index
    %c0_123 = arith.constant 0 : index
    %c0_124 = arith.constant 0 : index
    %176 = vector.load %arg6[%c6_122, %c0_123, %c0_124] : memref<9x8x8xbf16, #tpu.memory_space<vmem>>, vector<1x8x8xbf16>
    %177 = vector.shape_cast %176 : vector<1x8x8xbf16> to vector<8x8xbf16>
    %178 = arith.truncf %175 : vector<8x256xf32> to vector<8x256xbf16>
    %cst_125 = arith.constant dense<0.000000e+00> : vector<8x256xf32>
    %179 = tpu.matmul %177, %178, %cst_125 {dimension_numbers = #tpu.dot_dimension_numbers<[1], [0], [0], [1], [0, 0, 1, 1], [], []>} : vector<8x8xbf16>, vector<8x256xbf16>, vector<8x256xf32> -> vector<8x256xf32>
    %180 = arith.addf %172, %179 : vector<8x256xf32>
    %c0_126 = arith.constant 0 : index
    %c144_127 = arith.constant 144 : index
    %181 = vector.load %arg9[%c0_126, %c144_127] : memref<8x512xf32, #tpu.memory_space<vmem>>, vector<8x256xf32>
    %c7_128 = arith.constant 7 : index
    %c0_129 = arith.constant 0 : index
    %c0_130 = arith.constant 0 : index
    %182 = vector.load %arg6[%c7_128, %c0_129, %c0_130] : memref<9x8x8xbf16, #tpu.memory_space<vmem>>, vector<1x8x8xbf16>
    %183 = vector.shape_cast %182 : vector<1x8x8xbf16> to vector<8x8xbf16>
    %184 = arith.truncf %181 : vector<8x256xf32> to vector<8x256xbf16>
    %cst_131 = arith.constant dense<0.000000e+00> : vector<8x256xf32>
    %185 = tpu.matmul %183, %184, %cst_131 {dimension_numbers = #tpu.dot_dimension_numbers<[1], [0], [0], [1], [0, 0, 1, 1], [], []>} : vector<8x8xbf16>, vector<8x256xbf16>, vector<8x256xf32> -> vector<8x256xf32>
    %186 = arith.addf %180, %185 : vector<8x256xf32>
    %c0_132 = arith.constant 0 : index
    %c145_133 = arith.constant 145 : index
    %187 = vector.load %arg9[%c0_132, %c145_133] : memref<8x512xf32, #tpu.memory_space<vmem>>, vector<8x256xf32>
    %188 = vector.broadcast %5 : vector<1x256xf32> to vector<8x256xf32>
    %189 = arith.mulf %187, %188 : vector<8x256xf32>
    %c8_134 = arith.constant 8 : index
    %c0_135 = arith.constant 0 : index
    %c0_136 = arith.constant 0 : index
    %190 = vector.load %arg6[%c8_134, %c0_135, %c0_136] : memref<9x8x8xbf16, #tpu.memory_space<vmem>>, vector<1x8x8xbf16>
    %191 = vector.shape_cast %190 : vector<1x8x8xbf16> to vector<8x8xbf16>
    %192 = arith.truncf %189 : vector<8x256xf32> to vector<8x256xbf16>
    %cst_137 = arith.constant dense<0.000000e+00> : vector<8x256xf32>
    %193 = tpu.matmul %191, %192, %cst_137 {dimension_numbers = #tpu.dot_dimension_numbers<[1], [0], [0], [1], [0, 0, 1, 1], [], []>} : vector<8x8xbf16>, vector<8x256xbf16>, vector<8x256xf32> -> vector<8x256xf32>
    %194 = arith.addf %186, %193 : vector<8x256xf32>
    %cst_138 = arith.constant 2.000000e-01 : f32
    %195 = vector.broadcast %cst_138 : f32 to vector<8x256xf32>
    %196 = arith.mulf %195, %194 : vector<8x256xf32>
    %197 = arith.maximumf %194, %196 : vector<8x256xf32>
    %cst_139 = arith.constant dense<0.000000e+00> : vector<8xf32>
    %198 = vector.multi_reduction <add>, %197, %cst_139 [1] : vector<8x256xf32> to vector<8xf32>
    %199 = vector.shape_cast %198 : vector<8xf32> to vector<8x1xf32>
    %cst_140 = arith.constant 2.560000e+02 : f32
    %200 = vector.broadcast %cst_140 : f32 to vector<8x1xf32>
    %201 = arith.divf %199, %200 : vector<8x1xf32>
    %202 = arith.mulf %197, %197 : vector<8x256xf32>
    %cst_141 = arith.constant dense<0.000000e+00> : vector<8xf32>
    %203 = vector.multi_reduction <add>, %202, %cst_141 [1] : vector<8x256xf32> to vector<8xf32>
    %204 = vector.shape_cast %203 : vector<8xf32> to vector<8x1xf32>
    %cst_142 = arith.constant 2.560000e+02 : f32
    %205 = vector.broadcast %cst_142 : f32 to vector<8x1xf32>
    %206 = arith.divf %204, %205 : vector<8x1xf32>
    %207 = arith.mulf %201, %201 : vector<8x1xf32>
    %208 = arith.subf %206, %207 : vector<8x1xf32>
    %cst_143 = arith.constant 0.000000e+00 : f32
    %209 = vector.broadcast %cst_143 : f32 to vector<8x1xf32>
    %210 = arith.maximumf %208, %209 : vector<8x1xf32>
    %211 = vector.broadcast %201 : vector<8x1xf32> to vector<8x256xf32>
    %212 = arith.subf %197, %211 : vector<8x256xf32>
    %cst_144 = arith.constant 9.99999974E-6 : f32
    %213 = vector.broadcast %cst_144 : f32 to vector<8x1xf32>
    %214 = arith.addf %210, %213 : vector<8x1xf32>
    %215 = math.rsqrt %214 : vector<8x1xf32>
    %216 = vector.broadcast %215 : vector<8x1xf32> to vector<8x256xf32>
    %217 = arith.mulf %212, %216 : vector<8x256xf32>
    %218 = vector.broadcast %15 : vector<8x1xf32> to vector<8x256xf32>
    %219 = arith.mulf %218, %217 : vector<8x256xf32>
    %220 = vector.broadcast %17 : vector<8x1xf32> to vector<8x256xf32>
    %221 = arith.addf %219, %220 : vector<8x256xf32>
    %c0_145 = arith.constant 0 : index
    %c0_146 = arith.constant 0 : index
    %c0_147 = arith.constant 0 : index
    %222 = vector.load %arg8[%c0_145, %c0_146, %c0_147] : memref<1x8x256xf32, #tpu.memory_space<vmem>>, vector<1x8x256xf32>
    %223 = vector.shape_cast %222 : vector<1x8x256xf32> to vector<8x256xf32>
    %224 = vector.shape_cast %221 : vector<8x256xf32> to vector<1x8x256xf32>
    tpu.vector_store %arg8[%c0_145, %c0_146, %c0_147], %224 {strides = array<i32>} : memref<1x8x256xf32, #tpu.memory_space<vmem>>, vector<1x8x256xf32>,
    return
  }
  func.func @transform_0(%arg0: i32) -> (i32, i32, i32) {
    %c0_i32 = arith.constant 0 : i32
    %c0_i32_0 = arith.constant 0 : i32
    %c0_i32_1 = arith.constant 0 : i32
    return %arg0, %c0_i32, %c0_i32_0 : i32, i32, i32
  }
  func.func @transform_1(%arg0: i32) -> (i32, i32, i32) {
    %c0_i32 = arith.constant 0 : i32
    %c0_i32_0 = arith.constant 0 : i32
    %c0_i32_1 = arith.constant 0 : i32
    return %arg0, %c0_i32, %c0_i32_0 : i32, i32, i32
  }
  func.func @transform_2(%arg0: i32) -> (i32, i32, i32) {
    %c0_i32 = arith.constant 0 : i32
    %c0_i32_0 = arith.constant 0 : i32
    %c0_i32_1 = arith.constant 0 : i32
    return %arg0, %c0_i32, %c0_i32_0 : i32, i32, i32
  }
  func.func @transform_3(%arg0: i32) -> (i32, i32) {
    %c0_i32 = arith.constant 0 : i32
    %c0_i32_0 = arith.constant 0 : i32
    %c0_i32_1 = arith.constant 0 : i32
    return %c0_i32, %c0_i32_0 : i32, i32
  }
  func.func @transform_4(%arg0: i32) -> (i32, i32, i32) {
    %c0_i32 = arith.constant 0 : i32
    %c0_i32_0 = arith.constant 0 : i32
    %c0_i32_1 = arith.constant 0 : i32
    %c0_i32_2 = arith.constant 0 : i32
    return %c0_i32, %c0_i32_0, %c0_i32_1 : i32, i32, i32
  }
  func.func @transform_5(%arg0: i32) -> (i32, i32, i32) {
    %c0_i32 = arith.constant 0 : i32
    %c0_i32_0 = arith.constant 0 : i32
    %c0_i32_1 = arith.constant 0 : i32
    %c0_i32_2 = arith.constant 0 : i32
    return %c0_i32, %c0_i32_0, %c0_i32_1 : i32, i32, i32
  }
  func.func @transform_6(%arg0: i32) -> (i32, i32) {
    %c0_i32 = arith.constant 0 : i32
    %c0_i32_0 = arith.constant 0 : i32
    %c0_i32_1 = arith.constant 0 : i32
    return %c0_i32, %c0_i32_0 : i32, i32
  }
  func.func @transform_7(%arg0: i32) -> (i32, i32, i32) {
    %c0_i32 = arith.constant 0 : i32
    %c0_i32_0 = arith.constant 0 : i32
    %c0_i32_1 = arith.constant 0 : i32
    return %arg0, %c0_i32, %c0_i32_0 : i32, i32, i32
  }
}

</mosaic_0001>

<llo_original>
// kernel: genblock_forward.1
$region0: #{genblock_forward.1}
  #allocation0 [shape = 'u32[]', space=smem, size = 0x4, offset = 0x4, fixed_abs, tag = 'smem constant byte address 0x4 - core index']
  #allocation1 [shape = 'u32[144,128]{1,0:T(1,128)}', space=vmem, size = 0x12000, scoped, tag = 'internal scratch']
  #allocation2 [shape = 'f32[8,512]{1,0:T(8,128)}', space=vmem, size = 0x4000, scoped, tag = 'scratch operand']
  %s0 = inlined_call_operand.hbm [shape: f32[2,4,256], index: 0, kind: input, shape index: {}]
  %s1 = inlined_call_operand.hbm [shape: f32[2,2,256], index: 1, kind: input, shape index: {}]
  %s2 = inlined_call_operand.hbm [shape: f32[2,8,4], index: 2, kind: input, shape index: {}]
  %s3 = inlined_call_operand.hbm [shape: f32[2,256], index: 3, kind: input, shape index: {}]
  %s4 = inlined_call_operand.hbm [shape: bf16[9,8,4], index: 4, kind: input, shape index: {}]
  %s5 = inlined_call_operand.hbm [shape: bf16[9,8,8], index: 5, kind: input, shape index: {}]
  %s6 = inlined_call_operand.hbm [shape: f32[8,4], index: 6, kind: input, shape index: {}]
  %s7 = inlined_call_operand.hbm [shape: f32[2,8,256], index: 7, kind: output, shape index: {}]
  %s8 = sld [smem:[#allocation0]]
  $region89: #{genblock_forward.1} parent=0
    _
  %s10 = ssub.s32 1, %s8
  %s11 = scalar_select 0, %s10, %s8
  $region1: #{genblock_forward.1} parent=0
    #allocation3 [shape = 'u8[8192]{0}', space=vmem, size = 0x2000, scoped, tag = 'input window, operand 0']
    #allocation4 [shape = 's32[2]{0}', space=sflag, size = 0x8, scoped, tag = 'scoped memory for genblock_forward.1']
    #allocation5 [shape = 's32[2]{0}', space=sflag, size = 0x8, scoped, tag = 'scoped memory for genblock_forward.1']
    #allocation6 [shape = 'u8[4096]{0}', space=vmem, size = 0x1000, scoped, tag = 'input window, operand 1']
    #allocation7 [shape = 's32[2]{0}', space=sflag, size = 0x8, scoped, tag = 'scoped memory for genblock_forward.1']
    #allocation8 [shape = 'u8[8192]{0}', space=vmem, size = 0x2000, scoped, tag = 'input window, operand 2']
    #allocation9 [shape = 'u8[2048]{0}', space=vmem, size = 0x800, scoped, tag = 'input window, operand 3, single buffered']
    #allocation10 [shape = 's32[1]{0}', space=sflag, size = 0x4, scoped, tag = 'scoped memory for genblock_forward.1']
    #allocation11 [shape = 'u8[18432]{0}', space=vmem, size = 0x4800, scoped, tag = 'input window, operand 4, single buffered']
    #allocation12 [shape = 'u8[18432]{0}', space=vmem, size = 0x4800, scoped, tag = 'input window, operand 5, single buffered']
    #allocation13 [shape = 's32[1]{0}', space=sflag, size = 0x4, scoped, tag = 'scoped memory for genblock_forward.1']
    #allocation14 [shape = 'u8[4096]{0}', space=vmem, size = 0x1000, scoped, tag = 'input window, operand 6, single buffered']
    #allocation15 [shape = 'u8[16384]{0}', space=vmem, size = 0x4000, scoped, tag = 'output window, operand 0']
    %12 = vsyncpa [#allocation4], 0
    %s13 = scalar_lea.sflag [#allocation4], 1
    %14 = vsyncpa %s13, 0
    %15 = vsyncpa [#allocation7], 0
    %s16 = scalar_lea.sflag [#allocation7], 1
    %17 = vsyncpa %s16, 0
    %18 = vsyncpa [#allocation10], 0
    %19 = vsyncpa [#allocation13], 0
    %20 = vsyncpa [#allocation5], 0
    %s21 = scalar_lea.sflag [#allocation5], 1
    %22 = vsyncpa %s21, 0
    loop: start=0, step=1, limit=4
    $region2: #{genblock_forward.1} parent=1 // loop_pre_header
      _
    $region3: #{genblock_forward.1} parent=1 // loop_header
      %s24 = sphi 0, %s28
      %p25 = scmp.ge.s32.totalorder %s24, 4
      %s34 = sphi 0, %s36
      %s37 = sphi 0, %s34
      %s38 = sphi 0, %s37
      %s54 = sphi 0, %s38
      %s60 = sphi 0, %s62
      %s63 = sphi 0, %s60
      %s64 = sphi 0, %s63
      %s80 = sphi 0, %s64
      %s86 = sphi 0, %s88
      %s89 = sphi 0, %s86
      %s90 = sphi 0, %s89
      %s106 = sphi 0, %s90
      %s110 = sphi 0, %s110
      %s112 = sphi 0, %s110
      %s113 = sphi 0, %s112
      %s127 = sphi 0, %s113
      %s131 = sphi 0, %s131
      %s133 = sphi 0, %s131
      %s134 = sphi 0, %s133
      %s148 = sphi 0, %s134
      %s152 = sphi 0, %s152
      %s154 = sphi 0, %s152
      %s155 = sphi 0, %s154
      %s169 = sphi 0, %s155
      %s173 = sphi 0, %s173
      %s175 = sphi 0, %s173
      %s176 = sphi 0, %s175
      %s190 = sphi 0, %s176
      %s196 = sphi 0, %s198
      %s199 = sphi 0, %s196
      %s200 = sphi 0, %s199
      %s216 = sphi 0, %s200
    $region4: #{genblock_forward.1} parent=1 // loop_header_branch
      %27 = sbr.rel (%p25) target = $region8
    $region5: #{genblock_forward.1} parent=1 // loop_body
      %s29 = ssub.s32 %s24, 1
      %s30 = ssub.s32 %s24, 2
      %s31 = sadd.s32 %s24, 1
      %s32 = ssub.s32 %s24, %s31
      %p33 = scmp.eq.s32.totalorder %s32, 0
      %s35 = sadd.s32 %s34, 1
      %s36 = scalar_select %p33, %s34, %s35
      %p39 = pneg %p33
      %p40 = scmp.eq.s32.totalorder %s24, 1
      %p41 = por %p39, %p40
      %p42 = scmp.ne.s32.totalorder %s34, %s37
      %p43 = scmp.eq.s32.totalorder %s24, 0
      %p44 = por %p42, %p43
      %p45 = scmp.ne.s32.totalorder %s34, %s37
      %p46 = scmp.eq.s32.totalorder %s29, 1
      %p47 = por %p45, %p46
      %p48 = scmp.ne.s32.totalorder %s37, %s38
      %p49 = scmp.eq.s32.totalorder %s29, 0
      %p50 = por %p48, %p49
      %p51 = scmp.ne.s32.totalorder %s37, %s38
      %p52 = scmp.eq.s32.totalorder %s30, 1
      %p53 = por %p51, %p52
      %p55 = scmp.ne.s32.totalorder %s38, %s54
      %p56 = scmp.eq.s32.totalorder %s30, 0
      %p57 = por %p55, %p56
      %s58 = ssub.s32 %s24, %s31
      %p59 = scmp.eq.s32.totalorder %s58, 0
      %s61 = sadd.s32 %s60, 1
      %s62 = scalar_select %p59, %s60, %s61
      %p65 = pneg %p59
      %p66 = scmp.eq.s32.totalorder %s24, 1
      %p67 = por %p65, %p66
      %p68 = scmp.ne.s32.totalorder %s60, %s63
      %p69 = scmp.eq.s32.totalorder %s24, 0
      %p70 = por %p68, %p69
      %p71 = scmp.ne.s32.totalorder %s60, %s63
      %p72 = scmp.eq.s32.totalorder %s29, 1
      %p73 = por %p71, %p72
      %p74 = scmp.ne.s32.totalorder %s63, %s64
      %p75 = scmp.eq.s32.totalorder %s29, 0
      %p76 = por %p74, %p75
      %p77 = scmp.ne.s32.totalorder %s63, %s64
      %p78 = scmp.eq.s32.totalorder %s30, 1
      %p79 = por %p77, %p78
      %p81 = scmp.ne.s32.totalorder %s64, %s80
      %p82 = scmp.eq.s32.totalorder %s30, 0
      %p83 = por %p81, %p82
      %s84 = ssub.s32 %s24, %s31
      %p85 = scmp.eq.s32.totalorder %s84, 0
      %s87 = sadd.s32 %s86, 1
      %s88 = scalar_select %p85, %s86, %s87
      %p91 = pneg %p85
      %p92 = scmp.eq.s32.totalorder %s24, 1
      %p93 = por %p91, %p92
      %p94 = scmp.ne.s32.totalorder %s86, %s89
      %p95 = scmp.eq.s32.totalorder %s24, 0
      %p96 = por %p94, %p95
      %p97 = scmp.ne.s32.totalorder %s86, %s89
      %p98 = scmp.eq.s32.totalorder %s29, 1
      %p99 = por %p97, %p98
      %p100 = scmp.ne.s32.totalorder %s89, %s90
      %p101 = scmp.eq.s32.totalorder %s29, 0
      %p102 = por %p100, %p101
      %p103 = scmp.ne.s32.totalorder %s89, %s90
      %p104 = scmp.eq.s32.totalorder %s30, 1
      %p105 = por %p103, %p104
      %p107 = scmp.ne.s32.totalorder %s90, %s106
      %p108 = scmp.eq.s32.totalorder %s30, 0
      %p109 = por %p107, %p108
      %s111 = sadd.s32 %s110, 1
      %p114 = scmp.eq.s32.totalorder %s24, 1
      %p115 = scmp.ne.s32.totalorder %s110, %s112
      %p116 = scmp.eq.s32.totalorder %s24, 0
      %p117 = por %p115, %p116
      %p118 = scmp.ne.s32.totalorder %s110, %s112
      %p119 = scmp.eq.s32.totalorder %s29, 1
      %p120 = por %p118, %p119
      %p121 = scmp.ne.s32.totalorder %s112, %s113
      %p122 = scmp.eq.s32.totalorder %s29, 0
      %p123 = por %p121, %p122
      %p124 = scmp.ne.s32.totalorder %s112, %s113
      %p125 = scmp.eq.s32.totalorder %s30, 1
      %p126 = por %p124, %p125
      %p128 = scmp.ne.s32.totalorder %s113, %s127
      %p129 = scmp.eq.s32.totalorder %s30, 0
      %p130 = por %p128, %p129
      %s132 = sadd.s32 %s131, 1
      %p135 = scmp.eq.s32.totalorder %s24, 1
      %p136 = scmp.ne.s32.totalorder %s131, %s133
      %p137 = scmp.eq.s32.totalorder %s24, 0
      %p138 = por %p136, %p137
      %p139 = scmp.ne.s32.totalorder %s131, %s133
      %p140 = scmp.eq.s32.totalorder %s29, 1
      %p141 = por %p139, %p140
      %p142 = scmp.ne.s32.totalorder %s133, %s134
      %p143 = scmp.eq.s32.totalorder %s29, 0
      %p144 = por %p142, %p143
      %p145 = scmp.ne.s32.totalorder %s133, %s134
      %p146 = scmp.eq.s32.totalorder %s30, 1
      %p147 = por %p145, %p146
      %p149 = scmp.ne.s32.totalorder %s134, %s148
      %p150 = scmp.eq.s32.totalorder %s30, 0
      %p151 = por %p149, %p150
      %s153 = sadd.s32 %s152, 1
      %p156 = scmp.eq.s32.totalorder %s24, 1
      %p157 = scmp.ne.s32.totalorder %s152, %s154
      %p158 = scmp.eq.s32.totalorder %s24, 0
      %p159 = por %p157, %p158
      %p160 = scmp.ne.s32.totalorder %s152, %s154
      %p161 = scmp.eq.s32.totalorder %s29, 1
      %p162 = por %p160, %p161
      %p163 = scmp.ne.s32.totalorder %s154, %s155
      %p164 = scmp.eq.s32.totalorder %s29, 0
      %p165 = por %p163, %p164
      %p166 = scmp.ne.s32.totalorder %s154, %s155
      %p167 = scmp.eq.s32.totalorder %s30, 1
      %p168 = por %p166, %p167
      %p170 = scmp.ne.s32.totalorder %s155, %s169
      %p171 = scmp.eq.s32.totalorder %s30, 0
      %p172 = por %p170, %p171
      %s174 = sadd.s32 %s173, 1
      %p177 = scmp.eq.s32.totalorder %s24, 1
      %p178 = scmp.ne.s32.totalorder %s173, %s175
      %p179 = scmp.eq.s32.totalorder %s24, 0
      %p180 = por %p178, %p179
      %p181 = scmp.ne.s32.totalorder %s173, %s175
      %p182 = scmp.eq.s32.totalorder %s29, 1
      %p183 = por %p181, %p182
      %p184 = scmp.ne.s32.totalorder %s175, %s176
      %p185 = scmp.eq.s32.totalorder %s29, 0
      %p186 = por %p184, %p185
      %p187 = scmp.ne.s32.totalorder %s175, %s176
      %p188 = scmp.eq.s32.totalorder %s30, 1
      %p189 = por %p187, %p188
      %p191 = scmp.ne.s32.totalorder %s176, %s190
      %p192 = scmp.eq.s32.totalorder %s30, 0
      %p193 = por %p191, %p192
      %s194 = ssub.s32 %s24, %s31
      %p195 = scmp.eq.s32.totalorder %s194, 0
      %s197 = sadd.s32 %s196, 1
      %s198 = scalar_select %p195, %s196, %s197
      %p201 = pneg %p195
      %p202 = scmp.eq.s32.totalorder %s24, 1
      %p203 = por %p201, %p202
      %p204 = scmp.ne.s32.totalorder %s196, %s199
      %p205 = scmp.eq.s32.totalorder %s24, 0
      %p206 = por %p204, %p205
      %p207 = scmp.ne.s32.totalorder %s196, %s199
      %p208 = scmp.eq.s32.totalorder %s29, 1
      %p209 = por %p207, %p208
      %p210 = scmp.ne.s32.totalorder %s199, %s200
      %p211 = scmp.eq.s32.totalorder %s29, 0
      %p212 = por %p210, %p211
      %p213 = scmp.ne.s32.totalorder %s199, %s200
      %p214 = scmp.eq.s32.totalorder %s30, 1
      %p215 = por %p213, %p214
      %p217 = scmp.ne.s32.totalorder %s200, %s216
      %p218 = scmp.eq.s32.totalorder %s30, 0
      %p219 = por %p217, %p218
      %p220 = scmp.le.s32.totalorder 1, %s24
      %p221 = scmp.lt.s32.totalorder %s24, 3
      %p222 = pnand %p220, %p221
      %p223 = pneg %p222
      // Predicated region
      $region9: #{genblock_forward.1} parent=5 // pred_check
        _
      $region10: #{genblock_forward.1} parent=5 // pred_check_branch
        %225 = sbr.rel (%p222) target = $region12
      $region11: #{genblock_forward.1} parent=5 // pred_region
        %s226 = ssub.s32 %s24, 1
        // Predicated region
        $region13: #{genblock_forward.1} parent=11 // pred_check
          %p227 = pneg %p123
        $region14: #{genblock_forward.1} parent=11 // pred_check_branch
          %229 = sbr.rel (%p227) target = $region16
        $region15: #{genblock_forward.1} parent=11 // pred_region
          %s231 = ssub.s32 64, 64
          %232 = vsyncadd [#allocation10], %s231
          %s234 = sshll.u32 [#allocation9], 4
          %s235 = int_to_ptr.vmem [resolvable:$true] %s234
          %237 = dma.hbm_to_vmem [thread:$0]  %s3, 64, %s235, [#allocation10]
        $region16: #{genblock_forward.1} parent=11 // pred_fallthru
          _
        // Predicated region
        $region17: #{genblock_forward.1} parent=11 // pred_check
          %p238 = pneg %p144
        $region18: #{genblock_forward.1} parent=11 // pred_check_branch
          %240 = sbr.rel (%p238) target = $region20
        $region19: #{genblock_forward.1} parent=11 // pred_region
          %s242 = ssub.s32 576, 576
          %243 = vsyncadd [#allocation10], %s242
          %s244 = sshll.u32 [#allocation11], 4
          %s245 = int_to_ptr.vmem [resolvable:$true] %s244
          %250 = dma.hbm_to_vmem [thread:$0]  %s4, 576, %s245, [#allocation10], 64, 64, 4
        $region20: #{genblock_forward.1} parent=11 // pred_fallthru
          _
        // Predicated region
        $region21: #{genblock_forward.1} parent=11 // pred_check
          %p251 = pneg %p165
        $region22: #{genblock_forward.1} parent=11 // pred_check_branch
          %253 = sbr.rel (%p251) target = $region24
        $region23: #{genblock_forward.1} parent=11 // pred_region
          %s255 = ssub.s32 576, 576
          %256 = vsyncadd [#allocation13], %s255
          %s257 = sshll.u32 [#allocation12], 4
          %s258 = int_to_ptr.vmem [resolvable:$true] %s257
          %263 = dma.hbm_to_vmem [thread:$0]  %s5, 576, %s258, [#allocation13], 64, 64, 4
        $region24: #{genblock_forward.1} parent=11 // pred_fallthru
          _
        // Predicated region
        $region25: #{genblock_forward.1} parent=11 // pred_check
          %p264 = pneg %p186
        $region26: #{genblock_forward.1} parent=11 // pred_check_branch
          %266 = sbr.rel (%p264) target = $region28
        $region27: #{genblock_forward.1} parent=11 // pred_region
          %s268 = ssub.s32 128, 128
          %269 = vsyncadd [#allocation13], %s268
          %s271 = sshll.u32 [#allocation14], 4
          %s272 = int_to_ptr.vmem [resolvable:$true] %s271
          %274 = dma.hbm_to_vmem [thread:$0]  %s6, 128, %s272, [#allocation13]
        $region28: #{genblock_forward.1} parent=11 // pred_fallthru
          _
      $region12: #{genblock_forward.1} parent=5 // pred_fallthru
        _
      %p275 = scmp.lt.s32.totalorder %s24, 2
      // Predicated region
      $region29: #{genblock_forward.1} parent=5 // pred_check
        %p276 = pneg %p275
      $region30: #{genblock_forward.1} parent=5 // pred_check_branch
        %278 = sbr.rel (%p276) target = $region32
      $region31: #{genblock_forward.1} parent=5 // pred_region
        // Predicated region
        $region33: #{genblock_forward.1} parent=31 // pred_check
          %p279 = pneg %p44
        $region34: #{genblock_forward.1} parent=31 // pred_check_branch
          %281 = sbr.rel (%p279) target = $region36
        $region35: #{genblock_forward.1} parent=31 // pred_region
          %s282 = sand.u32 %s34, 1
          %s283 = scalar_lea.sflag [#allocation4], %s282
          %s284 = sand.u32 %s34, 1
          %s285 = smul.addr %s284, 8
          %s286 = scalar_lea.vmem [#allocation3], %s285
          %s288 = ssub.s32 128, 128
          %289 = vsyncadd %s283, %s288
          %s290 = smul.addr %s24, 2
          %s291 = smul.addr %s290, 64
          %s292 = scalar_lea.hbm %s0, %s291
          %s294 = sshll.u32 %s286, 4
          %s295 = int_to_ptr.vmem [resolvable:$true] %s294
          %297 = dma.hbm_to_vmem [thread:$0]  %s292, 128, %s295, %s283
        $region36: #{genblock_forward.1} parent=31 // pred_fallthru
          _
        // Predicated region
        $region37: #{genblock_forward.1} parent=31 // pred_check
          %p298 = pneg %p70
        $region38: #{genblock_forward.1} parent=31 // pred_check_branch
          %300 = sbr.rel (%p298) target = $region40
        $region39: #{genblock_forward.1} parent=31 // pred_region
          %s301 = sand.u32 %s24, 1
          %s302 = scalar_lea.sflag [#allocation7], %s301
          %s303 = sand.u32 %s60, 1
          %s304 = smul.addr %s303, 4
          %s305 = scalar_lea.vmem [#allocation6], %s304
          %s307 = ssub.s32 64, 64
          %308 = vsyncadd %s302, %s307
          %s309 = smul.addr %s24, 2
          %s310 = smul.addr %s309, 32
          %s311 = scalar_lea.hbm %s1, %s310
          %s313 = sshll.u32 %s305, 4
          %s314 = int_to_ptr.vmem [resolvable:$true] %s313
          %316 = dma.hbm_to_vmem [thread:$0]  %s311, 64, %s314, %s302
        $region40: #{genblock_forward.1} parent=31 // pred_fallthru
          _
        // Predicated region
        $region41: #{genblock_forward.1} parent=31 // pred_check
          %p317 = pneg %p96
        $region42: #{genblock_forward.1} parent=31 // pred_check_branch
          %319 = sbr.rel (%p317) target = $region44
        $region43: #{genblock_forward.1} parent=31 // pred_region
          %s320 = sand.u32 %s24, 1
          %s321 = scalar_lea.sflag [#allocation7], %s320
          %s322 = sand.u32 %s86, 1
          %s323 = smul.addr %s322, 8
          %s324 = scalar_lea.vmem [#allocation8], %s323
          %s326 = ssub.s32 128, 128
          %327 = vsyncadd %s321, %s326
          %s328 = smul.addr %s24, 128
          %s329 = scalar_lea.hbm %s2, %s328
          %s331 = sshll.u32 %s324, 4
          %s332 = int_to_ptr.vmem [resolvable:$true] %s331
          %334 = dma.hbm_to_vmem [thread:$0]  %s329, 128, %s332, %s321
        $region44: #{genblock_forward.1} parent=31 // pred_fallthru
          _
      $region32: #{genblock_forward.1} parent=5 // pred_fallthru
        _
      %p335 = scmp.le.s32.totalorder 1, %s24
      %p336 = scmp.lt.s32.totalorder %s24, 3
      %p337 = pnand %p335, %p336
      %p338 = pneg %p337
      // Predicated region
      $region45: #{genblock_forward.1} parent=5 // pred_check
        _
      $region46: #{genblock_forward.1} parent=5 // pred_check_branch
        %340 = sbr.rel (%p337) target = $region48
      $region47: #{genblock_forward.1} parent=5 // pred_region
        %s341 = ssub.s32 %s24, 1
        %s342 = sand.u32 %s37, 1
        %s343 = scalar_lea.sflag [#allocation4], %s342
        %s344 = sand.u32 %s37, 1
        %s345 = smul.addr %s344, 8
        %s346 = scalar_lea.vmem [#allocation3], %s345
        // Predicated region
        $region49: #{genblock_forward.1} parent=47 // pred_check
          %p347 = pneg %p50
        $region50: #{genblock_forward.1} parent=47 // pred_check_branch
          %349 = sbr.rel (%p347) target = $region52
        $region51: #{genblock_forward.1} parent=47 // pred_region
          %350 = dma.done %s343, 128
        $region52: #{genblock_forward.1} parent=47 // pred_fallthru
          _
        %s351 = sand.u32 %s29, 1
        %s352 = scalar_lea.sflag [#allocation7], %s351
        %s353 = sand.u32 %s63, 1
        %s354 = smul.addr %s353, 4
        %s355 = scalar_lea.vmem [#allocation6], %s354
        // Predicated region
        $region53: #{genblock_forward.1} parent=47 // pred_check
          %p356 = pneg %p76
        $region54: #{genblock_forward.1} parent=47 // pred_check_branch
          %358 = sbr.rel (%p356) target = $region56
        $region55: #{genblock_forward.1} parent=47 // pred_region
          %359 = dma.done %s352, 64
        $region56: #{genblock_forward.1} parent=47 // pred_fallthru
          _
        %s360 = sand.u32 %s29, 1
        %s361 = scalar_lea.sflag [#allocation7], %s360
        %s362 = sand.u32 %s89, 1
        %s363 = smul.addr %s362, 8
        %s364 = scalar_lea.vmem [#allocation8], %s363
        // Predicated region
        $region57: #{genblock_forward.1} parent=47 // pred_check
          %p365 = pneg %p102
        $region58: #{genblock_forward.1} parent=47 // pred_check_branch
          %367 = sbr.rel (%p365) target = $region60
        $region59: #{genblock_forward.1} parent=47 // pred_region
          %368 = dma.done %s361, 128
        $region60: #{genblock_forward.1} parent=47 // pred_fallthru
          _
        // Predicated region
        $region61: #{genblock_forward.1} parent=47 // pred_check
          %p369 = pneg %p123
        $region62: #{genblock_forward.1} parent=47 // pred_check_branch
          %371 = sbr.rel (%p369) target = $region64
        $region63: #{genblock_forward.1} parent=47 // pred_region
          %372 = dma.done [#allocation10], 64
        $region64: #{genblock_forward.1} parent=47 // pred_fallthru
          _
        // Predicated region
        $region65: #{genblock_forward.1} parent=47 // pred_check
          %p373 = pneg %p144
        $region66: #{genblock_forward.1} parent=47 // pred_check_branch
          %375 = sbr.rel (%p373) target = $region68
        $region67: #{genblock_forward.1} parent=47 // pred_region
          %376 = dma.done [#allocation10], 576
        $region68: #{genblock_forward.1} parent=47 // pred_fallthru
          _
        // Predicated region
        $region69: #{genblock_forward.1} parent=47 // pred_check
          %p377 = pneg %p165
        $region70: #{genblock_forward.1} parent=47 // pred_check_branch
          %379 = sbr.rel (%p377) target = $region72
        $region71: #{genblock_forward.1} parent=47 // pred_region
          %380 = dma.done [#allocation13], 576
        $region72: #{genblock_forward.1} parent=47 // pred_fallthru
          _
        // Predicated region
        $region73: #{genblock_forward.1} parent=47 // pred_check
          %p381 = pneg %p186
        $region74: #{genblock_forward.1} parent=47 // pred_check_branch
          %383 = sbr.rel (%p381) target = $region76
        $region75: #{genblock_forward.1} parent=47 // pred_region
          %384 = dma.done [#allocation13], 128
        $region76: #{genblock_forward.1} parent=47 // pred_fallthru
          _
        %s385 = sand.u32 %s37, 1
        %s386 = scalar_lea.sflag [#allocation4], %s385
        %s387 = sand.u32 %s37, 1
        %s388 = smul.addr %s387, 8
        %s389 = scalar_lea.vmem [#allocation3], %s388
        %p390 = pneg %p50
        %p391 = pneg %p47
        %s392 = sand.u32 %s29, 1
        %s393 = scalar_lea.sflag [#allocation7], %s392
        %s394 = sand.u32 %s63, 1
        %s395 = smul.addr %s394, 4
        %s396 = scalar_lea.vmem [#allocation6], %s395
        %p397 = pneg %p76
        %p398 = pneg %p73
        %s399 = sand.u32 %s29, 1
        %s400 = scalar_lea.sflag [#allocation7], %s399
        %s401 = sand.u32 %s89, 1
        %s402 = smul.addr %s401, 8
        %s403 = scalar_lea.vmem [#allocation8], %s402
        %p404 = pneg %p102
        %p405 = pneg %p99
        %p406 = pneg %p123
        %p407 = pneg %p120
        %p408 = pneg %p144
        %p409 = pneg %p141
        %p410 = pneg %p165
        %p411 = pneg %p162
        %p412 = pneg %p186
        %p413 = pneg %p183
        %p414 = pneg %p212
        %p415 = pneg %p209
        %s416 = sand.u32 %s199, 1
        %s417 = scalar_lea.sflag [#allocation5], %s416
        %s418 = sand.u32 %s199, 1
        %s419 = smul.addr %s418, 16
        %s420 = scalar_lea.vmem [#allocation15], %s419
        %422 = vst [vmem:[#allocation2] sm:$0xff] 0.0
        %423 = vst [vmem:[#allocation2 + $0x18] sm:$0xff] 0.0
        %v424 = vld [vmem:[#allocation9] ss:$2 sm:$0x3]
        %s425 = scalar_lea.vmem [#allocation9], 1
        %v426 = vld [vmem:[%s425] ss:$2 sm:$0x3]
        %v427 = vld [vmem:[#allocation14] sm:$0xff]
        %v428 = vld [vmem:[%s364] sm:$0xff]
        %v429 = vld [vmem:[%s355] ss:$2 sm:$0x3]
        %s430 = scalar_lea.vmem %s355, 1 [#allocation6]
        %v431 = vld [vmem:[%s430] ss:$2 sm:$0x3]
        %v432 = vld [vmem:[%s346] sm:$0xff]
        %v434 = vcombine.high %v432, %v432
        %436 = vst [vmem:[#allocation2 + $0x8] sm:$0xf] %v432
        %437 = vst [vmem:[#allocation2 + $0x10] sm:$0xf] %v434
        %439 = vset.pattern.permute.xlu0 1
        %440 = vperm.xlu0 %439, %v427
        %v441 = vpop.permute.xlu0 %440
        %v444 = vlaneseq
        %v445 = vshrl.u32 %v444, 7
        %v446 = vsub.s32 0, %v445
        %v447 = vrot.slane %v429, %v446
        %v448 = vlaneseq
        %v449 = vshrl.u32 %v448, 7
        %v450 = vsub.s32 1, %v449
        %v451 = vrot.slane %v429, %v450
        %v454 = vmul.f32 %v441, %v447
        %v455 = vmul.f32 %v441, %v451
        %456 = vset.pattern.permute.xlu0 0
        %457 = vperm.xlu0 %456, %v427
        %v458 = vpop.permute.xlu0 %457
        %v460 = vadd.f32 %v458, %v454
        %v461 = vadd.f32 %v458, %v455
        %v462 = vld [vmem:[#allocation2] sm:$0xf]
        %v463 = vld [vmem:[#allocation2 + $0x8] sm:$0xf]
        %v464 = vld [vmem:[#allocation2 + $0x10] sm:$0xf]
        %v466 = vlaneseq
        %v467 = vshrl.u32 %v466, 7
        %v468 = vsub.s32 0, %v467
        %v469 = vrot.slane %v424, %v468
        %v470 = vlaneseq
        %v471 = vshrl.u32 %v470, 7
        %v472 = vsub.s32 1, %v471
        %v473 = vrot.slane %v424, %v472
        %474 = vrot.lane.b32.xlu0 %v469, 111
        %v475 = vpop.permute.xlu0 %474
        %476 = vrot.lane.b32.xlu0 %v473, 111
        %v477 = vpop.permute.xlu0 %476
        %vm478 = vcmask 908288
        %v479 = vsel %vm478, %v475, %v477
        %v483 = vmul.f32 %v462, %v475
        %v484 = vmul.f32 %v463, %v479
        %v485 = vmul.f32 %v464, %v477
        %v486 = vld [vmem:[#allocation11] sm:$0xf]
        %v487 = vpack.c.bf16 %v483, %v483
        %v488 = vpack.c.bf16 %v484, %v484
        %v489 = vpack.c.bf16 %v485, %v485
        %493 = vrot.lane.b32.xlu0 %v487, 17
        %v494 = vpop.permute.xlu0 %493
        %495 = vrot.lane.b32.xlu0 %v488, 17
        %v496 = vpop.permute.xlu0 %495
        %497 = vrot.lane.b32.xlu0 %v489, 17
        %v498 = vpop.permute.xlu0 %497
        %vm499 = vcmask 138240
        %v500 = vsel %vm499, %v494, %v496
        %v501 = vsel %vm499, %v496, %v498
        %vm502 = vcmask 31744
        %v504 = vsel %vm502, %v486, 0
        %vm506 = vcmask 1041408
        %v508 = vsel %vm506, %v500, 0
        %v511 = vsel %vm506, %v501, 0
        %513 = vmatprep.subr.bf16.mxu0 %v511
        %514 = vmatpush1.bf16.msra.mxu0 %v508
        %515 = vmatprep.subr.bf16.mxu0 0
        %516 = vmatpush1.bf16.msra.mxu0 0
        %517 = vmatprep.subr.bf16.mxu0 0
        %518 = vmatpush1.bf16.msra.mxu0 0
        %519 = vmatprep.subr.bf16.mxu0 0
        %520 = vmatpush1.bf16.msra.mxu0 0
        %521 = vmatprep.subr.bf16.mxu0 0
        %522 = vmatpush1.bf16.msra.mxu0 0
        %523 = vmatprep.subr.bf16.mxu0 0
        %524 = vmatpush1.bf16.msra.mxu0 0
        %525 = vmatprep.subr.bf16.mxu0 0
        %526 = vmatpush1.bf16.msra.mxu0 0
        %527 = vmatprep.subr.bf16.mxu0 0
        %528 = vmatpush1.bf16.msra.mxu0 0
        %529 = vmatprep.subr.bf16.mxu0 0
        %530 = vmatpush1.bf16.msra.mxu0 0
        %531 = vmatprep.subr.bf16.mxu0 0
        %532 = vmatpush1.bf16.msra.mxu0 0
        %533 = vmatprep.subr.bf16.mxu0 0
        %534 = vmatpush1.bf16.msra.mxu0 0
        %535 = vmatprep.subr.bf16.mxu0 0
        %536 = vmatpush1.bf16.msra.mxu0 0
        %537 = vmatprep.subr.bf16.mxu0 0
        %538 = vmatpush1.bf16.msra.mxu0 0
        %539 = vmatprep.subr.bf16.mxu0 0
        %540 = vmatpush1.bf16.msra.mxu0 0
        %541 = vmatprep.subr.bf16.mxu0 0
        %542 = vmatpush1.bf16.msra.mxu0 0
        %543 = vmatprep.subr.bf16.mxu0 0
        %544 = vmatpush1.bf16.msra.mxu0 0
        %545 = vmatprep.mubr.bf16.mxu0 0
        %546 = vmatmul.mubr.bf16.gmra.mrb[0].mxu0 %v504
        %v547 = vpop.f32.mrb[0].mxu0
        %v548 = vadd.f32 0.0, %v547
        %v549 = vpop.f32.mrb[0].mxu0
        %v550 = vadd.f32 0.0, %v549
        %v551 = vpop.f32.mrb[0].mxu0
        %v552 = vpop.f32.mrb[0].mxu0
        %553 = vdwg.mxu0
        %v554 = vadd.f32 %v460, %v548
        %v555 = vadd.f32 %v461, %v550
        %s556 = scalar_lea.vmem [#allocation11], 4
        %v557 = vld [vmem:[%s556] sm:$0xf]
        %v558 = vpack.c.bf16 %v462, %v462
        %v559 = vpack.c.bf16 %v463, %v463
        %v560 = vpack.c.bf16 %v464, %v464
        %564 = vrot.lane.b32.xlu0 %v558, 16
        %v565 = vpop.permute.xlu0 %564
        %566 = vrot.lane.b32.xlu0 %v559, 16
        %v567 = vpop.permute.xlu0 %566
        %568 = vrot.lane.b32.xlu0 %v560, 16
        %v569 = vpop.permute.xlu0 %568
        %vm570 = vcmask 130048
        %v571 = vsel %vm570, %v565, %v567
        %v572 = vsel %vm570, %v567, %v569
        %v574 = vsel %vm502, %v557, 0
        %v577 = vsel %vm506, %v571, 0
        %v580 = vsel %vm506, %v572, 0
        %582 = vmatprep.subr.bf16.mxu0 %v580
        %583 = vmatpush1.bf16.msra.mxu0 %v577
        %584 = vmatprep.subr.bf16.mxu0 0
        %585 = vmatpush1.bf16.msra.mxu0 0
        %586 = vmatprep.subr.bf16.mxu0 0
        %587 = vmatpush1.bf16.msra.mxu0 0
        %588 = vmatprep.subr.bf16.mxu0 0
        %589 = vmatpush1.bf16.msra.mxu0 0
        %590 = vmatprep.subr.bf16.mxu0 0
        %591 = vmatpush1.bf16.msra.mxu0 0
        %592 = vmatprep.subr.bf16.mxu0 0
        %593 = vmatpush1.bf16.msra.mxu0 0
        %594 = vmatprep.subr.bf16.mxu0 0
        %595 = vmatpush1.bf16.msra.mxu0 0
        %596 = vmatprep.subr.bf16.mxu0 0
        %597 = vmatpush1.bf16.msra.mxu0 0
        %598 = vmatprep.subr.bf16.mxu0 0
        %599 = vmatpush1.bf16.msra.mxu0 0
        %600 = vmatprep.subr.bf16.mxu0 0
        %601 = vmatpush1.bf16.msra.mxu0 0
        %602 = vmatprep.subr.bf16.mxu0 0
        %603 = vmatpush1.bf16.msra.mxu0 0
        %604 = vmatprep.subr.bf16.mxu0 0
        %605 = vmatpush1.bf16.msra.mxu0 0
        %606 = vmatprep.subr.bf16.mxu0 0
        %607 = vmatpush1.bf16.msra.mxu0 0
        %608 = vmatprep.subr.bf16.mxu0 0
        %609 = vmatpush1.bf16.msra.mxu0 0
        %610 = vmatprep.subr.bf16.mxu0 0
        %611 = vmatpush1.bf16.msra.mxu0 0
        %612 = vmatprep.subr.bf16.mxu0 0
        %613 = vmatpush1.bf16.msra.mxu0 0
        %614 = vmatprep.mubr.bf16.mxu0 0
        %615 = vmatmul.mubr.bf16.gmra.mrb[0].mxu0 %v574
        %v616 = vpop.f32.mrb[0].mxu0
        %v617 = vadd.f32 0.0, %v616
        %v618 = vpop.f32.mrb[0].mxu0
        %v619 = vadd.f32 0.0, %v618
        %v620 = vpop.f32.mrb[0].mxu0
        %v621 = vpop.f32.mrb[0].mxu0
        %622 = vdwg.mxu0
        %v623 = vadd.f32 %v554, %v617
        %v624 = vadd.f32 %v555, %v619
        %v626 = vlaneseq
        %v627 = vshrl.u32 %v626, 7
        %v628 = vsub.s32 0, %v627
        %v629 = vrot.slane %v426, %v628
        %v630 = vlaneseq
        %v631 = vshrl.u32 %v630, 7
        %v632 = vsub.s32 1, %v631
        %v633 = vrot.slane %v426, %v632
        %634 = vrot.lane.b32.xlu0 %v629, 113
        %v635 = vpop.permute.xlu0 %634
        %636 = vrot.lane.b32.xlu0 %v633, 113
        %v637 = vpop.permute.xlu0 %636
        %vm638 = vcmask 924672
        %v639 = vsel %vm638, %v635, %v637
        %v643 = vmul.f32 %v462, %v635
        %v644 = vmul.f32 %v463, %v639
        %v645 = vmul.f32 %v464, %v637
        %s646 = scalar_lea.vmem [#allocation11], 8
        %v647 = vld [vmem:[%s646] sm:$0xf]
        %v648 = vpack.c.bf16 %v643, %v643
        %v649 = vpack.c.bf16 %v644, %v644
        %v650 = vpack.c.bf16 %v645, %v645
        %654 = vrot.lane.b32.xlu0 %v648, 15
        %v655 = vpop.permute.xlu0 %654
        %656 = vrot.lane.b32.xlu0 %v649, 15
        %v657 = vpop.permute.xlu0 %656
        %658 = vrot.lane.b32.xlu0 %v650, 15
        %v659 = vpop.permute.xlu0 %658
        %vm660 = vcmask 121856
        %v661 = vsel %vm660, %v655, %v657
        %v662 = vsel %vm660, %v657, %v659
        %v664 = vsel %vm502, %v647, 0
        %v667 = vsel %vm506, %v661, 0
        %v670 = vsel %vm506, %v662, 0
        %672 = vmatprep.subr.bf16.mxu0 %v670
        %673 = vmatpush1.bf16.msra.mxu0 %v667
        %674 = vmatprep.subr.bf16.mxu0 0
        %675 = vmatpush1.bf16.msra.mxu0 0
        %676 = vmatprep.subr.bf16.mxu0 0
        %677 = vmatpush1.bf16.msra.mxu0 0
        %678 = vmatprep.subr.bf16.mxu0 0
        %679 = vmatpush1.bf16.msra.mxu0 0
        %680 = vmatprep.subr.bf16.mxu0 0
        %681 = vmatpush1.bf16.msra.mxu0 0
        %682 = vmatprep.subr.bf16.mxu0 0
        %683 = vmatpush1.bf16.msra.mxu0 0
        %684 = vmatprep.subr.bf16.mxu0 0
        %685 = vmatpush1.bf16.msra.mxu0 0
        %686 = vmatprep.subr.bf16.mxu0 0
        %687 = vmatpush1.bf16.msra.mxu0 0
        %688 = vmatprep.subr.bf16.mxu0 0
        %689 = vmatpush1.bf16.msra.mxu0 0
        %690 = vmatprep.subr.bf16.mxu0 0
        %691 = vmatpush1.bf16.msra.mxu0 0
        %692 = vmatprep.subr.bf16.mxu0 0
        %693 = vmatpush1.bf16.msra.mxu0 0
        %694 = vmatprep.subr.bf16.mxu0 0
        %695 = vmatpush1.bf16.msra.mxu0 0
        %696 = vmatprep.subr.bf16.mxu0 0
        %697 = vmatpush1.bf16.msra.mxu0 0
        %698 = vmatprep.subr.bf16.mxu0 0
        %699 = vmatpush1.bf16.msra.mxu0 0
        %700 = vmatprep.subr.bf16.mxu0 0
        %701 = vmatpush1.bf16.msra.mxu0 0
        %702 = vmatprep.subr.bf16.mxu0 0
        %703 = vmatpush1.bf16.msra.mxu0 0
        %704 = vmatprep.mubr.bf16.mxu0 0
        %705 = vmatmul.mubr.bf16.gmra.mrb[0].mxu0 %v664
        %v706 = vpop.f32.mrb[0].mxu0
        %v707 = vadd.f32 0.0, %v706
        %v708 = vpop.f32.mrb[0].mxu0
        %v709 = vadd.f32 0.0, %v708
        %v710 = vpop.f32.mrb[0].mxu0
        %v711 = vpop.f32.mrb[0].mxu0
        %712 = vdwg.mxu0
        %v713 = vadd.f32 %v623, %v707
        %v714 = vadd.f32 %v624, %v709
        %715 = vrot.lane.b32.xlu0 %v469, 127
        %v716 = vpop.permute.xlu0 %715
        %717 = vrot.lane.b32.xlu0 %v473, 127
        %v718 = vpop.permute.xlu0 %717
        %vm719 = vcmask 1039360
        %v720 = vsel %vm719, %v716, %v718
        %v724 = vmul.f32 %v462, %v716
        %v725 = vmul.f32 %v463, %v720
        %v726 = vmul.f32 %v464, %v718
        %s727 = scalar_lea.vmem [#allocation11], 12
        %v728 = vld [vmem:[%s727] sm:$0xf]
        %v729 = vpack.c.bf16 %v724, %v724
        %v730 = vpack.c.bf16 %v725, %v725
        %v731 = vpack.c.bf16 %v726, %v726
        %735 = vrot.lane.b32.xlu0 %v729, 1
        %v736 = vpop.permute.xlu0 %735
        %737 = vrot.lane.b32.xlu0 %v730, 1
        %v738 = vpop.permute.xlu0 %737
        %739 = vrot.lane.b32.xlu0 %v731, 1
        %v740 = vpop.permute.xlu0 %739
        %vm741 = vcmask 7168
        %v742 = vsel %vm741, %v736, %v738
        %v743 = vsel %vm741, %v738, %v740
        %v745 = vsel %vm502, %v728, 0
        %v748 = vsel %vm506, %v742, 0
        %v751 = vsel %vm506, %v743, 0
        %753 = vmatprep.subr.bf16.mxu0 %v751
        %754 = vmatpush1.bf16.msra.mxu0 %v748
        %755 = vmatprep.subr.bf16.mxu0 0
        %756 = vmatpush1.bf16.msra.mxu0 0
        %757 = vmatprep.subr.bf16.mxu0 0
        %758 = vmatpush1.bf16.msra.mxu0 0
        %759 = vmatprep.subr.bf16.mxu0 0
        %760 = vmatpush1.bf16.msra.mxu0 0
        %761 = vmatprep.subr.bf16.mxu0 0
        %762 = vmatpush1.bf16.msra.mxu0 0
        %763 = vmatprep.subr.bf16.mxu0 0
        %764 = vmatpush1.bf16.msra.mxu0 0
        %765 = vmatprep.subr.bf16.mxu0 0
        %766 = vmatpush1.bf16.msra.mxu0 0
        %767 = vmatprep.subr.bf16.mxu0 0
        %768 = vmatpush1.bf16.msra.mxu0 0
        %769 = vmatprep.subr.bf16.mxu0 0
        %770 = vmatpush1.bf16.msra.mxu0 0
        %771 = vmatprep.subr.bf16.mxu0 0
        %772 = vmatpush1.bf16.msra.mxu0 0
        %773 = vmatprep.subr.bf16.mxu0 0
        %774 = vmatpush1.bf16.msra.mxu0 0
        %775 = vmatprep.subr.bf16.mxu0 0
        %776 = vmatpush1.bf16.msra.mxu0 0
        %777 = vmatprep.subr.bf16.mxu0 0
        %778 = vmatpush1.bf16.msra.mxu0 0
        %779 = vmatprep.subr.bf16.mxu0 0
        %780 = vmatpush1.bf16.msra.mxu0 0
        %781 = vmatprep.subr.bf16.mxu0 0
        %782 = vmatpush1.bf16.msra.mxu0 0
        %783 = vmatprep.subr.bf16.mxu0 0
        %784 = vmatpush1.bf16.msra.mxu0 0
        %785 = vmatprep.mubr.bf16.mxu0 0
        %786 = vmatmul.mubr.bf16.gmra.mrb[0].mxu0 %v745
        %v787 = vpop.f32.mrb[0].mxu0
        %v788 = vadd.f32 0.0, %v787
        %v789 = vpop.f32.mrb[0].mxu0
        %v790 = vadd.f32 0.0, %v789
        %v791 = vpop.f32.mrb[0].mxu0
        %v792 = vpop.f32.mrb[0].mxu0
        %793 = vdwg.mxu0
        %v794 = vadd.f32 %v713, %v788
        %v795 = vadd.f32 %v714, %v790
        %s796 = scalar_lea.vmem [#allocation11], 16
        %v797 = vld [vmem:[%s796] sm:$0xf]
        %v799 = vsel %vm502, %v797, 0
        %v802 = vsel %vm506, %v559, 0
        %v805 = vsel %vm506, %v560, 0
        %807 = vmatprep.subr.bf16.mxu0 %v805
        %808 = vmatpush1.bf16.msra.mxu0 %v802
        %809 = vmatprep.subr.bf16.mxu0 0
        %810 = vmatpush1.bf16.msra.mxu0 0
        %811 = vmatprep.subr.bf16.mxu0 0
        %812 = vmatpush1.bf16.msra.mxu0 0
        %813 = vmatprep.subr.bf16.mxu0 0
        %814 = vmatpush1.bf16.msra.mxu0 0
        %815 = vmatprep.subr.bf16.mxu0 0
        %816 = vmatpush1.bf16.msra.mxu0 0
        %817 = vmatprep.subr.bf16.mxu0 0
        %818 = vmatpush1.bf16.msra.mxu0 0
        %819 = vmatprep.subr.bf16.mxu0 0
        %820 = vmatpush1.bf16.msra.mxu0 0
        %821 = vmatprep.subr.bf16.mxu0 0
        %822 = vmatpush1.bf16.msra.mxu0 0
        %823 = vmatprep.subr.bf16.mxu0 0
        %824 = vmatpush1.bf16.msra.mxu0 0
        %825 = vmatprep.subr.bf16.mxu0 0
        %826 = vmatpush1.bf16.msra.mxu0 0
        %827 = vmatprep.subr.bf16.mxu0 0
        %828 = vmatpush1.bf16.msra.mxu0 0
        %829 = vmatprep.subr.bf16.mxu0 0
        %830 = vmatpush1.bf16.msra.mxu0 0
        %831 = vmatprep.subr.bf16.mxu0 0
        %832 = vmatpush1.bf16.msra.mxu0 0
        %833 = vmatprep.subr.bf16.mxu0 0
        %834 = vmatpush1.bf16.msra.mxu0 0
        %835 = vmatprep.subr.bf16.mxu0 0
        %836 = vmatpush1.bf16.msra.mxu0 0
        %837 = vmatprep.subr.bf16.mxu0 0
        %838 = vmatpush1.bf16.msra.mxu0 0
        %839 = vmatprep.mubr.bf16.mxu0 0
        %840 = vmatmul.mubr.bf16.gmra.mrb[0].mxu0 %v799
        %v841 = vpop.f32.mrb[0].mxu0
        %v842 = vadd.f32 0.0, %v841
        %v843 = vpop.f32.mrb[0].mxu0
        %v844 = vadd.f32 0.0, %v843
        %v845 = vpop.f32.mrb[0].mxu0
        %v846 = vpop.f32.mrb[0].mxu0
        %847 = vdwg.mxu0
        %v848 = vadd.f32 %v794, %v842
        %v849 = vadd.f32 %v795, %v844
        %v850 = vld [vmem:[#allocation2 + $0x8] sm:$0xf]
        %v851 = vld [vmem:[#allocation2 + $0x10] sm:$0xf]
        %v852 = vld [vmem:[#allocation2 + $0x18] sm:$0xf]
        %853 = vrot.lane.b32.xlu0 %v629, 1
        %v854 = vpop.permute.xlu0 %853
        %855 = vrot.lane.b32.xlu0 %v633, 1
        %v856 = vpop.permute.xlu0 %855
        %vm857 = vcmask 7168
        %v858 = vsel %vm857, %v854, %v856
        %v862 = vmul.f32 %v850, %v854
        %v863 = vmul.f32 %v851, %v858
        %v864 = vmul.f32 %v852, %v856
        %s865 = scalar_lea.vmem [#allocation11], 20
        %v866 = vld [vmem:[%s865] sm:$0xf]
        %v867 = vpack.c.bf16 %v862, %v862
        %v868 = vpack.c.bf16 %v863, %v863
        %v869 = vpack.c.bf16 %v864, %v864
        %873 = vrot.lane.b32.xlu0 %v867, 127
        %v874 = vpop.permute.xlu0 %873
        %875 = vrot.lane.b32.xlu0 %v868, 127
        %v876 = vpop.permute.xlu0 %875
        %877 = vrot.lane.b32.xlu0 %v869, 127
        %v878 = vpop.permute.xlu0 %877
        %vm879 = vcmask 1039360
        %v880 = vsel %vm879, %v874, %v876
        %v881 = vsel %vm879, %v876, %v878
        %v883 = vsel %vm502, %v866, 0
        %v886 = vsel %vm506, %v880, 0
        %v889 = vsel %vm506, %v881, 0
        %891 = vmatprep.subr.bf16.mxu0 %v889
        %892 = vmatpush1.bf16.msra.mxu0 %v886
        %893 = vmatprep.subr.bf16.mxu0 0
        %894 = vmatpush1.bf16.msra.mxu0 0
        %895 = vmatprep.subr.bf16.mxu0 0
        %896 = vmatpush1.bf16.msra.mxu0 0
        %897 = vmatprep.subr.bf16.mxu0 0
        %898 = vmatpush1.bf16.msra.mxu0 0
        %899 = vmatprep.subr.bf16.mxu0 0
        %900 = vmatpush1.bf16.msra.mxu0 0
        %901 = vmatprep.subr.bf16.mxu0 0
        %902 = vmatpush1.bf16.msra.mxu0 0
        %903 = vmatprep.subr.bf16.mxu0 0
        %904 = vmatpush1.bf16.msra.mxu0 0
        %905 = vmatprep.subr.bf16.mxu0 0
        %906 = vmatpush1.bf16.msra.mxu0 0
        %907 = vmatprep.subr.bf16.mxu0 0
        %908 = vmatpush1.bf16.msra.mxu0 0
        %909 = vmatprep.subr.bf16.mxu0 0
        %910 = vmatpush1.bf16.msra.mxu0 0
        %911 = vmatprep.subr.bf16.mxu0 0
        %912 = vmatpush1.bf16.msra.mxu0 0
        %913 = vmatprep.subr.bf16.mxu0 0
        %914 = vmatpush1.bf16.msra.mxu0 0
        %915 = vmatprep.subr.bf16.mxu0 0
        %916 = vmatpush1.bf16.msra.mxu0 0
        %917 = vmatprep.subr.bf16.mxu0 0
        %918 = vmatpush1.bf16.msra.mxu0 0
        %919 = vmatprep.subr.bf16.mxu0 0
        %920 = vmatpush1.bf16.msra.mxu0 0
        %921 = vmatprep.subr.bf16.mxu0 0
        %922 = vmatpush1.bf16.msra.mxu0 0
        %923 = vmatprep.mubr.bf16.mxu0 0
        %924 = vmatmul.mubr.bf16.gmra.mrb[0].mxu0 %v883
        %v925 = vpop.f32.mrb[0].mxu0
        %v926 = vadd.f32 0.0, %v925
        %v927 = vpop.f32.mrb[0].mxu0
        %v928 = vadd.f32 0.0, %v927
        %v929 = vpop.f32.mrb[0].mxu0
        %v930 = vpop.f32.mrb[0].mxu0
        %931 = vdwg.mxu0
        %v932 = vadd.f32 %v848, %v926
        %v933 = vadd.f32 %v849, %v928
        %934 = vrot.lane.b32.xlu0 %v469, 15
        %v935 = vpop.permute.xlu0 %934
        %936 = vrot.lane.b32.xlu0 %v473, 15
        %v937 = vpop.permute.xlu0 %936
        %vm938 = vcmask 121856
        %v939 = vsel %vm938, %v935, %v937
        %v943 = vmul.f32 %v850, %v935
        %v944 = vmul.f32 %v851, %v939
        %v945 = vmul.f32 %v852, %v937
        %s946 = scalar_lea.vmem [#allocation11], 24
        %v947 = vld [vmem:[%s946] sm:$0xf]
        %v948 = vpack.c.bf16 %v943, %v943
        %v949 = vpack.c.bf16 %v944, %v944
        %v950 = vpack.c.bf16 %v945, %v945
        %954 = vrot.lane.b32.xlu0 %v948, 113
        %v955 = vpop.permute.xlu0 %954
        %956 = vrot.lane.b32.xlu0 %v949, 113
        %v957 = vpop.permute.xlu0 %956
        %958 = vrot.lane.b32.xlu0 %v950, 113
        %v959 = vpop.permute.xlu0 %958
        %vm960 = vcmask 924672
        %v961 = vsel %vm960, %v955, %v957
        %v962 = vsel %vm960, %v957, %v959
        %v964 = vsel %vm502, %v947, 0
        %v967 = vsel %vm506, %v961, 0
        %v970 = vsel %vm506, %v962, 0
        %972 = vmatprep.subr.bf16.mxu0 %v970
        %973 = vmatpush1.bf16.msra.mxu0 %v967
        %974 = vmatprep.subr.bf16.mxu0 0
        %975 = vmatpush1.bf16.msra.mxu0 0
        %976 = vmatprep.subr.bf16.mxu0 0
        %977 = vmatpush1.bf16.msra.mxu0 0
        %978 = vmatprep.subr.bf16.mxu0 0
        %979 = vmatpush1.bf16.msra.mxu0 0
        %980 = vmatprep.subr.bf16.mxu0 0
        %981 = vmatpush1.bf16.msra.mxu0 0
        %982 = vmatprep.subr.bf16.mxu0 0
        %983 = vmatpush1.bf16.msra.mxu0 0
        %984 = vmatprep.subr.bf16.mxu0 0
        %985 = vmatpush1.bf16.msra.mxu0 0
        %986 = vmatprep.subr.bf16.mxu0 0
        %987 = vmatpush1.bf16.msra.mxu0 0
        %988 = vmatprep.subr.bf16.mxu0 0
        %989 = vmatpush1.bf16.msra.mxu0 0
        %990 = vmatprep.subr.bf16.mxu0 0
        %991 = vmatpush1.bf16.msra.mxu0 0
        %992 = vmatprep.subr.bf16.mxu0 0
        %993 = vmatpush1.bf16.msra.mxu0 0
        %994 = vmatprep.subr.bf16.mxu0 0
        %995 = vmatpush1.bf16.msra.mxu0 0
        %996 = vmatprep.subr.bf16.mxu0 0
        %997 = vmatpush1.bf16.msra.mxu0 0
        %998 = vmatprep.subr.bf16.mxu0 0
        %999 = vmatpush1.bf16.msra.mxu0 0
        %1000 = vmatprep.subr.bf16.mxu0 0
        %1001 = vmatpush1.bf16.msra.mxu0 0
        %1002 = vmatprep.subr.bf16.mxu0 0
        %1003 = vmatpush1.bf16.msra.mxu0 0
        %1004 = vmatprep.mubr.bf16.mxu0 0
        %1005 = vmatmul.mubr.bf16.gmra.mrb[0].mxu0 %v964
        %v1006 = vpop.f32.mrb[0].mxu0
        %v1007 = vadd.f32 0.0, %v1006
        %v1008 = vpop.f32.mrb[0].mxu0
        %v1009 = vadd.f32 0.0, %v1008
        %v1010 = vpop.f32.mrb[0].mxu0
        %v1011 = vpop.f32.mrb[0].mxu0
        %1012 = vdwg.mxu0
        %v1013 = vadd.f32 %v932, %v1007
        %v1014 = vadd.f32 %v933, %v1009
        %s1015 = scalar_lea.vmem [#allocation11], 28
        %v1016 = vld [vmem:[%s1015] sm:$0xf]
        %v1017 = vpack.c.bf16 %v850, %v850
        %v1018 = vpack.c.bf16 %v851, %v851
        %v1019 = vpack.c.bf16 %v852, %v852
        %1023 = vrot.lane.b32.xlu0 %v1017, 112
        %v1024 = vpop.permute.xlu0 %1023
        %1025 = vrot.lane.b32.xlu0 %v1018, 112
        %v1026 = vpop.permute.xlu0 %1025
        %1027 = vrot.lane.b32.xlu0 %v1019, 112
        %v1028 = vpop.permute.xlu0 %1027
        %vm1029 = vcmask 916480
        %v1030 = vsel %vm1029, %v1024, %v1026
        %v1031 = vsel %vm1029, %v1026, %v1028
        %v1033 = vsel %vm502, %v1016, 0
        %v1036 = vsel %vm506, %v1030, 0
        %v1039 = vsel %vm506, %v1031, 0
        %1041 = vmatprep.subr.bf16.mxu0 %v1039
        %1042 = vmatpush1.bf16.msra.mxu0 %v1036
        %1043 = vmatprep.subr.bf16.mxu0 0
        %1044 = vmatpush1.bf16.msra.mxu0 0
        %1045 = vmatprep.subr.bf16.mxu0 0
        %1046 = vmatpush1.bf16.msra.mxu0 0
        %1047 = vmatprep.subr.bf16.mxu0 0
        %1048 = vmatpush1.bf16.msra.mxu0 0
        %1049 = vmatprep.subr.bf16.mxu0 0
        %1050 = vmatpush1.bf16.msra.mxu0 0
        %1051 = vmatprep.subr.bf16.mxu0 0
        %1052 = vmatpush1.bf16.msra.mxu0 0
        %1053 = vmatprep.subr.bf16.mxu0 0
        %1054 = vmatpush1.bf16.msra.mxu0 0
        %1055 = vmatprep.subr.bf16.mxu0 0
        %1056 = vmatpush1.bf16.msra.mxu0 0
        %1057 = vmatprep.subr.bf16.mxu0 0
        %1058 = vmatpush1.bf16.msra.mxu0 0
        %1059 = vmatprep.subr.bf16.mxu0 0
        %1060 = vmatpush1.bf16.msra.mxu0 0
        %1061 = vmatprep.subr.bf16.mxu0 0
        %1062 = vmatpush1.bf16.msra.mxu0 0
        %1063 = vmatprep.subr.bf16.mxu0 0
        %1064 = vmatpush1.bf16.msra.mxu0 0
        %1065 = vmatprep.subr.bf16.mxu0 0
        %1066 = vmatpush1.bf16.msra.mxu0 0
        %1067 = vmatprep.subr.bf16.mxu0 0
        %1068 = vmatpush1.bf16.msra.mxu0 0
        %1069 = vmatprep.subr.bf16.mxu0 0
        %1070 = vmatpush1.bf16.msra.mxu0 0
        %1071 = vmatprep.subr.bf16.mxu0 0
        %1072 = vmatpush1.bf16.msra.mxu0 0
        %1073 = vmatprep.mubr.bf16.mxu0 0
        %1074 = vmatmul.mubr.bf16.gmra.mrb[0].mxu0 %v1033
        %v1075 = vpop.f32.mrb[0].mxu0
        %v1076 = vadd.f32 0.0, %v1075
        %v1077 = vpop.f32.mrb[0].mxu0
        %v1078 = vadd.f32 0.0, %v1077
        %v1079 = vpop.f32.mrb[0].mxu0
        %v1080 = vpop.f32.mrb[0].mxu0
        %1081 = vdwg.mxu0
        %v1082 = vadd.f32 %v1013, %v1076
        %v1083 = vadd.f32 %v1014, %v1078
        %1084 = vrot.lane.b32.xlu0 %v629, 17
        %v1085 = vpop.permute.xlu0 %1084
        %1086 = vrot.lane.b32.xlu0 %v633, 17
        %v1087 = vpop.permute.xlu0 %1086
        %vm1088 = vcmask 138240
        %v1089 = vsel %vm1088, %v1085, %v1087
        %v1093 = vmul.f32 %v850, %v1085
        %v1094 = vmul.f32 %v851, %v1089
        %v1095 = vmul.f32 %v852, %v1087
        %s1096 = scalar_lea.vmem [#allocation11], 32
        %v1097 = vld [vmem:[%s1096] sm:$0xf]
        %v1098 = vpack.c.bf16 %v1093, %v1093
        %v1099 = vpack.c.bf16 %v1094, %v1094
        %v1100 = vpack.c.bf16 %v1095, %v1095
        %1104 = vrot.lane.b32.xlu0 %v1098, 111
        %v1105 = vpop.permute.xlu0 %1104
        %1106 = vrot.lane.b32.xlu0 %v1099, 111
        %v1107 = vpop.permute.xlu0 %1106
        %1108 = vrot.lane.b32.xlu0 %v1100, 111
        %v1109 = vpop.permute.xlu0 %1108
        %vm1110 = vcmask 908288
        %v1111 = vsel %vm1110, %v1105, %v1107
        %v1112 = vsel %vm1110, %v1107, %v1109
        %v1114 = vsel %vm502, %v1097, 0
        %v1117 = vsel %vm506, %v1111, 0
        %v1120 = vsel %vm506, %v1112, 0
        %1122 = vmatprep.subr.bf16.mxu0 %v1120
        %1123 = vmatpush1.bf16.msra.mxu0 %v1117
        %1124 = vmatprep.subr.bf16.mxu0 0
        %1125 = vmatpush1.bf16.msra.mxu0 0
        %1126 = vmatprep.subr.bf16.mxu0 0
        %1127 = vmatpush1.bf16.msra.mxu0 0
        %1128 = vmatprep.subr.bf16.mxu0 0
        %1129 = vmatpush1.bf16.msra.mxu0 0
        %1130 = vmatprep.subr.bf16.mxu0 0
        %1131 = vmatpush1.bf16.msra.mxu0 0
        %1132 = vmatprep.subr.bf16.mxu0 0
        %1133 = vmatpush1.bf16.msra.mxu0 0
        %1134 = vmatprep.subr.bf16.mxu0 0
        %1135 = vmatpush1.bf16.msra.mxu0 0
        %1136 = vmatprep.subr.bf16.mxu0 0
        %1137 = vmatpush1.bf16.msra.mxu0 0
        %1138 = vmatprep.subr.bf16.mxu0 0
        %1139 = vmatpush1.bf16.msra.mxu0 0
        %1140 = vmatprep.subr.bf16.mxu0 0
        %1141 = vmatpush1.bf16.msra.mxu0 0
        %1142 = vmatprep.subr.bf16.mxu0 0
        %1143 = vmatpush1.bf16.msra.mxu0 0
        %1144 = vmatprep.subr.bf16.mxu0 0
        %1145 = vmatpush1.bf16.msra.mxu0 0
        %1146 = vmatprep.subr.bf16.mxu0 0
        %1147 = vmatpush1.bf16.msra.mxu0 0
        %1148 = vmatprep.subr.bf16.mxu0 0
        %1149 = vmatpush1.bf16.msra.mxu0 0
        %1150 = vmatprep.subr.bf16.mxu0 0
        %1151 = vmatpush1.bf16.msra.mxu0 0
        %1152 = vmatprep.subr.bf16.mxu0 0
        %1153 = vmatpush1.bf16.msra.mxu0 0
        %1154 = vmatprep.mubr.bf16.mxu0 0
        %1155 = vmatmul.mubr.bf16.gmra.mrb[0].mxu0 %v1114
        %v1156 = vpop.f32.mrb[0].mxu0
        %v1157 = vadd.f32 0.0, %v1156
        %v1158 = vpop.f32.mrb[0].mxu0
        %v1159 = vadd.f32 0.0, %v1158
        %v1160 = vpop.f32.mrb[0].mxu0
        %v1161 = vpop.f32.mrb[0].mxu0
        %1162 = vdwg.mxu0
        %v1163 = vadd.f32 %v1082, %v1157
        %v1164 = vadd.f32 %v1083, %v1159
        %v1165 = vmul.f32 %v1163, 0.2
        %v1166 = vmul.f32 %v1164, 0.2
        %v1167 = vmax.f32 %v1163, %v1165
        %v1168 = vmax.f32 %v1164, %v1166
        %v1169 = vadd.f32 %v1167, %v1168
        %1170 = vadd.xlane.f32.xlu0 %v1169
        %v1171 = vpop.xlane.xlu0 %1170
        %v1172 = vrcp.pop 256.0
        %v1173 = vmul.f32 %v1171, %v1172
        %v1174 = vmul.f32 %v1167, %v1167
        %v1175 = vmul.f32 %v1168, %v1168
        %v1176 = vadd.f32 %v1174, %v1175
        %1177 = vadd.xlane.f32.xlu0 %v1176
        %v1178 = vpop.xlane.xlu0 %1177
        %v1179 = vmul.f32 %v1178, %v1172
        %v1180 = vmul.f32 %v1173, %v1173
        %v1181 = vsub.f32 %v1179, %v1180
        %v1182 = vmax.f32 %v1181, 0.0
        %v1183 = vsub.f32 %v1167, %v1173
        %v1184 = vsub.f32 %v1168, %v1173
        %v1185 = vadd.f32 %v1182, 1e-05
        %v1186 = vrsqrt.pop %v1185
        %v1187 = vmul.f32 %v1183, %v1186
        %v1188 = vmul.f32 %v1184, %v1186
        %1190 = vset.pattern.permute.xlu0 0
        %1191 = vperm.xlu0 %1190, %v428
        %v1192 = vpop.permute.xlu0 %1191
        %v1194 = vmul.f32 %v1192, %v1187
        %v1195 = vmul.f32 %v1192, %v1188
        %1196 = vset.pattern.permute.xlu0 1
        %1197 = vperm.xlu0 %1196, %v428
        %v1198 = vpop.permute.xlu0 %1197
        %v1200 = vadd.f32 %v1194, %v1198
        %v1201 = vadd.f32 %v1195, %v1198
        %1202 = vst [vmem:[#allocation2 + $0x8] sm:$0xff] %v1200
        %1203 = vst [vmem:[#allocation2 + $0x10] sm:$0xff] %v1201
        %1204 = vset.pattern.permute.xlu0 3
        %1205 = vperm.xlu0 %1204, %v427
        %v1206 = vpop.permute.xlu0 %1205
        %v1209 = vlaneseq
        %v1210 = vshrl.u32 %v1209, 7
        %v1211 = vsub.s32 0, %v1210
        %v1212 = vrot.slane %v431, %v1211
        %v1213 = vlaneseq
        %v1214 = vshrl.u32 %v1213, 7
        %v1215 = vsub.s32 1, %v1214
        %v1216 = vrot.slane %v431, %v1215
        %v1219 = vmul.f32 %v1206, %v1212
        %v1220 = vmul.f32 %v1206, %v1216
        %1221 = vset.pattern.permute.xlu0 2
        %1222 = vperm.xlu0 %1221, %v427
        %v1223 = vpop.permute.xlu0 %1222
        %v1225 = vadd.f32 %v1223, %v1219
        %v1226 = vadd.f32 %v1223, %v1220
        %v1227 = vld [vmem:[#allocation2] sm:$0xff]
        %v1228 = vld [vmem:[#allocation2 + $0x8] sm:$0xff]
        %v1229 = vld [vmem:[#allocation2 + $0x10] sm:$0xff]
        %v1230 = vmul.f32 %v1227, %v475
        %v1231 = vmul.f32 %v1228, %v479
        %v1232 = vmul.f32 %v1229, %v477
        %v1233 = vld [vmem:[#allocation12] sm:$0xf]
        %v1234 = vpack.c.bf16 %v1230, %v1230
        %v1235 = vpack.c.bf16 %v1231, %v1231
        %v1236 = vpack.c.bf16 %v1232, %v1232
        %1240 = vrot.lane.b32.xlu0 %v1234, 17
        %v1241 = vpop.permute.xlu0 %1240
        %1242 = vrot.lane.b32.xlu0 %v1235, 17
        %v1243 = vpop.permute.xlu0 %1242
        %1244 = vrot.lane.b32.xlu0 %v1236, 17
        %v1245 = vpop.permute.xlu0 %1244
        %v1246 = vsel %vm499, %v1241, %v1243
        %v1247 = vsel %vm499, %v1243, %v1245
        %vm1248 = vcmask 64512
        %v1250 = vsel %vm1248, %v1233, 0
        %vm1252 = vcmask 1043456
        %v1254 = vsel %vm1252, %v1246, 0
        %v1257 = vsel %vm1252, %v1247, 0
        %1259 = vmatprep.subr.bf16.mxu0 %v1257
        %1260 = vmatpush1.bf16.msra.mxu0 %v1254
        %1261 = vmatprep.subr.bf16.mxu0 0
        %1262 = vmatpush1.bf16.msra.mxu0 0
        %1263 = vmatprep.subr.bf16.mxu0 0
        %1264 = vmatpush1.bf16.msra.mxu0 0
        %1265 = vmatprep.subr.bf16.mxu0 0
        %1266 = vmatpush1.bf16.msra.mxu0 0
        %1267 = vmatprep.subr.bf16.mxu0 0
        %1268 = vmatpush1.bf16.msra.mxu0 0
        %1269 = vmatprep.subr.bf16.mxu0 0
        %1270 = vmatpush1.bf16.msra.mxu0 0
        %1271 = vmatprep.subr.bf16.mxu0 0
        %1272 = vmatpush1.bf16.msra.mxu0 0
        %1273 = vmatprep.subr.bf16.mxu0 0
        %1274 = vmatpush1.bf16.msra.mxu0 0
        %1275 = vmatprep.subr.bf16.mxu0 0
        %1276 = vmatpush1.bf16.msra.mxu0 0
        %1277 = vmatprep.subr.bf16.mxu0 0
        %1278 = vmatpush1.bf16.msra.mxu0 0
        %1279 = vmatprep.subr.bf16.mxu0 0
        %1280 = vmatpush1.bf16.msra.mxu0 0
        %1281 = vmatprep.subr.bf16.mxu0 0
        %1282 = vmatpush1.bf16.msra.mxu0 0
        %1283 = vmatprep.subr.bf16.mxu0 0
        %1284 = vmatpush1.bf16.msra.mxu0 0
        %1285 = vmatprep.subr.bf16.mxu0 0
        %1286 = vmatpush1.bf16.msra.mxu0 0
        %1287 = vmatprep.subr.bf16.mxu0 0
        %1288 = vmatpush1.bf16.msra.mxu0 0
        %1289 = vmatprep.subr.bf16.mxu0 0
        %1290 = vmatpush1.bf16.msra.mxu0 0
        %1291 = vmatprep.mubr.bf16.mxu0 0
        %1292 = vmatmul.mubr.bf16.gmra.mrb[0].mxu0 %v1250
        %v1293 = vpop.f32.mrb[0].mxu0
        %v1294 = vadd.f32 0.0, %v1293
        %v1295 = vpop.f32.mrb[0].mxu0
        %v1296 = vadd.f32 0.0, %v1295
        %v1297 = vpop.f32.mrb[0].mxu0
        %v1298 = vpop.f32.mrb[0].mxu0
        %1299 = vdwg.mxu0
        %v1300 = vadd.f32 %v1225, %v1294
        %v1301 = vadd.f32 %v1226, %v1296
        %s1302 = scalar_lea.vmem [#allocation12], 4
        %v1303 = vld [vmem:[%s1302] sm:$0xf]
        %v1304 = vpack.c.bf16 %v1227, %v1227
        %v1305 = vpack.c.bf16 %v1228, %v1228
        %v1306 = vpack.c.bf16 %v1229, %v1229
        %1310 = vrot.lane.b32.xlu0 %v1304, 16
        %v1311 = vpop.permute.xlu0 %1310
        %1312 = vrot.lane.b32.xlu0 %v1305, 16
        %v1313 = vpop.permute.xlu0 %1312
        %1314 = vrot.lane.b32.xlu0 %v1306, 16
        %v1315 = vpop.permute.xlu0 %1314
        %v1316 = vsel %vm570, %v1311, %v1313
        %v1317 = vsel %vm570, %v1313, %v1315
        %v1319 = vsel %vm1248, %v1303, 0
        %v1322 = vsel %vm1252, %v1316, 0
        %v1325 = vsel %vm1252, %v1317, 0
        %1327 = vmatprep.subr.bf16.mxu0 %v1325
        %1328 = vmatpush1.bf16.msra.mxu0 %v1322
        %1329 = vmatprep.subr.bf16.mxu0 0
        %1330 = vmatpush1.bf16.msra.mxu0 0
        %1331 = vmatprep.subr.bf16.mxu0 0
        %1332 = vmatpush1.bf16.msra.mxu0 0
        %1333 = vmatprep.subr.bf16.mxu0 0
        %1334 = vmatpush1.bf16.msra.mxu0 0
        %1335 = vmatprep.subr.bf16.mxu0 0
        %1336 = vmatpush1.bf16.msra.mxu0 0
        %1337 = vmatprep.subr.bf16.mxu0 0
        %1338 = vmatpush1.bf16.msra.mxu0 0
        %1339 = vmatprep.subr.bf16.mxu0 0
        %1340 = vmatpush1.bf16.msra.mxu0 0
        %1341 = vmatprep.subr.bf16.mxu0 0
        %1342 = vmatpush1.bf16.msra.mxu0 0
        %1343 = vmatprep.subr.bf16.mxu0 0
        %1344 = vmatpush1.bf16.msra.mxu0 0
        %1345 = vmatprep.subr.bf16.mxu0 0
        %1346 = vmatpush1.bf16.msra.mxu0 0
        %1347 = vmatprep.subr.bf16.mxu0 0
        %1348 = vmatpush1.bf16.msra.mxu0 0
        %1349 = vmatprep.subr.bf16.mxu0 0
        %1350 = vmatpush1.bf16.msra.mxu0 0
        %1351 = vmatprep.subr.bf16.mxu0 0
        %1352 = vmatpush1.bf16.msra.mxu0 0
        %1353 = vmatprep.subr.bf16.mxu0 0
        %1354 = vmatpush1.bf16.msra.mxu0 0
        %1355 = vmatprep.subr.bf16.mxu0 0
        %1356 = vmatpush1.bf16.msra.mxu0 0
        %1357 = vmatprep.subr.bf16.mxu0 0
        %1358 = vmatpush1.bf16.msra.mxu0 0
        %1359 = vmatprep.mubr.bf16.mxu0 0
        %1360 = vmatmul.mubr.bf16.gmra.mrb[0].mxu0 %v1319
        %v1361 = vpop.f32.mrb[0].mxu0
        %v1362 = vadd.f32 0.0, %v1361
        %v1363 = vpop.f32.mrb[0].mxu0
        %v1364 = vadd.f32 0.0, %v1363
        %v1365 = vpop.f32.mrb[0].mxu0
        %v1366 = vpop.f32.mrb[0].mxu0
        %1367 = vdwg.mxu0
        %v1368 = vadd.f32 %v1300, %v1362
        %v1369 = vadd.f32 %v1301, %v1364
        %v1370 = vmul.f32 %v1227, %v635
        %v1371 = vmul.f32 %v1228, %v639
        %v1372 = vmul.f32 %v1229, %v637
        %s1373 = scalar_lea.vmem [#allocation12], 8
        %v1374 = vld [vmem:[%s1373] sm:$0xf]
        %v1375 = vpack.c.bf16 %v1370, %v1370
        %v1376 = vpack.c.bf16 %v1371, %v1371
        %v1377 = vpack.c.bf16 %v1372, %v1372
        %1381 = vrot.lane.b32.xlu0 %v1375, 15
        %v1382 = vpop.permute.xlu0 %1381
        %1383 = vrot.lane.b32.xlu0 %v1376, 15
        %v1384 = vpop.permute.xlu0 %1383
        %1385 = vrot.lane.b32.xlu0 %v1377, 15
        %v1386 = vpop.permute.xlu0 %1385
        %v1387 = vsel %vm660, %v1382, %v1384
        %v1388 = vsel %vm660, %v1384, %v1386
        %v1390 = vsel %vm1248, %v1374, 0
        %v1393 = vsel %vm1252, %v1387, 0
        %v1396 = vsel %vm1252, %v1388, 0
        %1398 = vmatprep.subr.bf16.mxu0 %v1396
        %1399 = vmatpush1.bf16.msra.mxu0 %v1393
        %1400 = vmatprep.subr.bf16.mxu0 0
        %1401 = vmatpush1.bf16.msra.mxu0 0
        %1402 = vmatprep.subr.bf16.mxu0 0
        %1403 = vmatpush1.bf16.msra.mxu0 0
        %1404 = vmatprep.subr.bf16.mxu0 0
        %1405 = vmatpush1.bf16.msra.mxu0 0
        %1406 = vmatprep.subr.bf16.mxu0 0
        %1407 = vmatpush1.bf16.msra.mxu0 0
        %1408 = vmatprep.subr.bf16.mxu0 0
        %1409 = vmatpush1.bf16.msra.mxu0 0
        %1410 = vmatprep.subr.bf16.mxu0 0
        %1411 = vmatpush1.bf16.msra.mxu0 0
        %1412 = vmatprep.subr.bf16.mxu0 0
        %1413 = vmatpush1.bf16.msra.mxu0 0
        %1414 = vmatprep.subr.bf16.mxu0 0
        %1415 = vmatpush1.bf16.msra.mxu0 0
        %1416 = vmatprep.subr.bf16.mxu0 0
        %1417 = vmatpush1.bf16.msra.mxu0 0
        %1418 = vmatprep.subr.bf16.mxu0 0
        %1419 = vmatpush1.bf16.msra.mxu0 0
        %1420 = vmatprep.subr.bf16.mxu0 0
        %1421 = vmatpush1.bf16.msra.mxu0 0
        %1422 = vmatprep.subr.bf16.mxu0 0
        %1423 = vmatpush1.bf16.msra.mxu0 0
        %1424 = vmatprep.subr.bf16.mxu0 0
        %1425 = vmatpush1.bf16.msra.mxu0 0
        %1426 = vmatprep.subr.bf16.mxu0 0
        %1427 = vmatpush1.bf16.msra.mxu0 0
        %1428 = vmatprep.subr.bf16.mxu0 0
        %1429 = vmatpush1.bf16.msra.mxu0 0
        %1430 = vmatprep.mubr.bf16.mxu0 0
        %1431 = vmatmul.mubr.bf16.gmra.mrb[0].mxu0 %v1390
        %v1432 = vpop.f32.mrb[0].mxu0
        %v1433 = vadd.f32 0.0, %v1432
        %v1434 = vpop.f32.mrb[0].mxu0
        %v1435 = vadd.f32 0.0, %v1434
        %v1436 = vpop.f32.mrb[0].mxu0
        %v1437 = vpop.f32.mrb[0].mxu0
        %1438 = vdwg.mxu0
        %v1439 = vadd.f32 %v1368, %v1433
        %v1440 = vadd.f32 %v1369, %v1435
        %v1441 = vmul.f32 %v1227, %v716
        %v1442 = vmul.f32 %v1228, %v720
        %v1443 = vmul.f32 %v1229, %v718
        %s1444 = scalar_lea.vmem [#allocation12], 12
        %v1445 = vld [vmem:[%s1444] sm:$0xf]
        %v1446 = vpack.c.bf16 %v1441, %v1441
        %v1447 = vpack.c.bf16 %v1442, %v1442
        %v1448 = vpack.c.bf16 %v1443, %v1443
        %1452 = vrot.lane.b32.xlu0 %v1446, 1
        %v1453 = vpop.permute.xlu0 %1452
        %1454 = vrot.lane.b32.xlu0 %v1447, 1
        %v1455 = vpop.permute.xlu0 %1454
        %1456 = vrot.lane.b32.xlu0 %v1448, 1
        %v1457 = vpop.permute.xlu0 %1456
        %v1458 = vsel %vm741, %v1453, %v1455
        %v1459 = vsel %vm741, %v1455, %v1457
        %v1461 = vsel %vm1248, %v1445, 0
        %v1464 = vsel %vm1252, %v1458, 0
        %v1467 = vsel %vm1252, %v1459, 0
        %1469 = vmatprep.subr.bf16.mxu0 %v1467
        %1470 = vmatpush1.bf16.msra.mxu0 %v1464
        %1471 = vmatprep.subr.bf16.mxu0 0
        %1472 = vmatpush1.bf16.msra.mxu0 0
        %1473 = vmatprep.subr.bf16.mxu0 0
        %1474 = vmatpush1.bf16.msra.mxu0 0
        %1475 = vmatprep.subr.bf16.mxu0 0
        %1476 = vmatpush1.bf16.msra.mxu0 0
        %1477 = vmatprep.subr.bf16.mxu0 0
        %1478 = vmatpush1.bf16.msra.mxu0 0
        %1479 = vmatprep.subr.bf16.mxu0 0
        %1480 = vmatpush1.bf16.msra.mxu0 0
        %1481 = vmatprep.subr.bf16.mxu0 0
        %1482 = vmatpush1.bf16.msra.mxu0 0
        %1483 = vmatprep.subr.bf16.mxu0 0
        %1484 = vmatpush1.bf16.msra.mxu0 0
        %1485 = vmatprep.subr.bf16.mxu0 0
        %1486 = vmatpush1.bf16.msra.mxu0 0
        %1487 = vmatprep.subr.bf16.mxu0 0
        %1488 = vmatpush1.bf16.msra.mxu0 0
        %1489 = vmatprep.subr.bf16.mxu0 0
        %1490 = vmatpush1.bf16.msra.mxu0 0
        %1491 = vmatprep.subr.bf16.mxu0 0
        %1492 = vmatpush1.bf16.msra.mxu0 0
        %1493 = vmatprep.subr.bf16.mxu0 0
        %1494 = vmatpush1.bf16.msra.mxu0 0
        %1495 = vmatprep.subr.bf16.mxu0 0
        %1496 = vmatpush1.bf16.msra.mxu0 0
        %1497 = vmatprep.subr.bf16.mxu0 0
        %1498 = vmatpush1.bf16.msra.mxu0 0
        %1499 = vmatprep.subr.bf16.mxu0 0
        %1500 = vmatpush1.bf16.msra.mxu0 0
        %1501 = vmatprep.mubr.bf16.mxu0 0
        %1502 = vmatmul.mubr.bf16.gmra.mrb[0].mxu0 %v1461
        %v1503 = vpop.f32.mrb[0].mxu0
        %v1504 = vadd.f32 0.0, %v1503
        %v1505 = vpop.f32.mrb[0].mxu0
        %v1506 = vadd.f32 0.0, %v1505
        %v1507 = vpop.f32.mrb[0].mxu0
        %v1508 = vpop.f32.mrb[0].mxu0
        %1509 = vdwg.mxu0
        %v1510 = vadd.f32 %v1439, %v1504
        %v1511 = vadd.f32 %v1440, %v1506
        %s1512 = scalar_lea.vmem [#allocation12], 16
        %v1513 = vld [vmem:[%s1512] sm:$0xf]
        %v1515 = vsel %vm1248, %v1513, 0
        %v1518 = vsel %vm1252, %v1305, 0
        %v1521 = vsel %vm1252, %v1306, 0
        %1523 = vmatprep.subr.bf16.mxu0 %v1521
        %1524 = vmatpush1.bf16.msra.mxu0 %v1518
        %1525 = vmatprep.subr.bf16.mxu0 0
        %1526 = vmatpush1.bf16.msra.mxu0 0
        %1527 = vmatprep.subr.bf16.mxu0 0
        %1528 = vmatpush1.bf16.msra.mxu0 0
        %1529 = vmatprep.subr.bf16.mxu0 0
        %1530 = vmatpush1.bf16.msra.mxu0 0
        %1531 = vmatprep.subr.bf16.mxu0 0
        %1532 = vmatpush1.bf16.msra.mxu0 0
        %1533 = vmatprep.subr.bf16.mxu0 0
        %1534 = vmatpush1.bf16.msra.mxu0 0
        %1535 = vmatprep.subr.bf16.mxu0 0
        %1536 = vmatpush1.bf16.msra.mxu0 0
        %1537 = vmatprep.subr.bf16.mxu0 0
        %1538 = vmatpush1.bf16.msra.mxu0 0
        %1539 = vmatprep.subr.bf16.mxu0 0
        %1540 = vmatpush1.bf16.msra.mxu0 0
        %1541 = vmatprep.subr.bf16.mxu0 0
        %1542 = vmatpush1.bf16.msra.mxu0 0
        %1543 = vmatprep.subr.bf16.mxu0 0
        %1544 = vmatpush1.bf16.msra.mxu0 0
        %1545 = vmatprep.subr.bf16.mxu0 0
        %1546 = vmatpush1.bf16.msra.mxu0 0
        %1547 = vmatprep.subr.bf16.mxu0 0
        %1548 = vmatpush1.bf16.msra.mxu0 0
        %1549 = vmatprep.subr.bf16.mxu0 0
        %1550 = vmatpush1.bf16.msra.mxu0 0
        %1551 = vmatprep.subr.bf16.mxu0 0
        %1552 = vmatpush1.bf16.msra.mxu0 0
        %1553 = vmatprep.subr.bf16.mxu0 0
        %1554 = vmatpush1.bf16.msra.mxu0 0
        %1555 = vmatprep.mubr.bf16.mxu0 0
        %1556 = vmatmul.mubr.bf16.gmra.mrb[0].mxu0 %v1515
        %v1557 = vpop.f32.mrb[0].mxu0
        %v1558 = vadd.f32 0.0, %v1557
        %v1559 = vpop.f32.mrb[0].mxu0
        %v1560 = vadd.f32 0.0, %v1559
        %v1561 = vpop.f32.mrb[0].mxu0
        %v1562 = vpop.f32.mrb[0].mxu0
        %1563 = vdwg.mxu0
        %v1564 = vadd.f32 %v1510, %v1558
        %v1565 = vadd.f32 %v1511, %v1560
        %v1566 = vld [vmem:[#allocation2 + $0x8] sm:$0xff]
        %v1567 = vld [vmem:[#allocation2 + $0x10] sm:$0xff]
        %v1568 = vld [vmem:[#allocation2 + $0x18] sm:$0xff]
        %v1569 = vmul.f32 %v1566, %v854
        %v1570 = vmul.f32 %v1567, %v858
        %v1571 = vmul.f32 %v1568, %v856
        %s1572 = scalar_lea.vmem [#allocation12], 20
        %v1573 = vld [vmem:[%s1572] sm:$0xf]
        %v1574 = vpack.c.bf16 %v1569, %v1569
        %v1575 = vpack.c.bf16 %v1570, %v1570
        %v1576 = vpack.c.bf16 %v1571, %v1571
        %1580 = vrot.lane.b32.xlu0 %v1574, 127
        %v1581 = vpop.permute.xlu0 %1580
        %1582 = vrot.lane.b32.xlu0 %v1575, 127
        %v1583 = vpop.permute.xlu0 %1582
        %1584 = vrot.lane.b32.xlu0 %v1576, 127
        %v1585 = vpop.permute.xlu0 %1584
        %v1586 = vsel %vm879, %v1581, %v1583
        %v1587 = vsel %vm879, %v1583, %v1585
        %v1589 = vsel %vm1248, %v1573, 0
        %v1592 = vsel %vm1252, %v1586, 0
        %v1595 = vsel %vm1252, %v1587, 0
        %1597 = vmatprep.subr.bf16.mxu0 %v1595
        %1598 = vmatpush1.bf16.msra.mxu0 %v1592
        %1599 = vmatprep.subr.bf16.mxu0 0
        %1600 = vmatpush1.bf16.msra.mxu0 0
        %1601 = vmatprep.subr.bf16.mxu0 0
        %1602 = vmatpush1.bf16.msra.mxu0 0
        %1603 = vmatprep.subr.bf16.mxu0 0
        %1604 = vmatpush1.bf16.msra.mxu0 0
        %1605 = vmatprep.subr.bf16.mxu0 0
        %1606 = vmatpush1.bf16.msra.mxu0 0
        %1607 = vmatprep.subr.bf16.mxu0 0
        %1608 = vmatpush1.bf16.msra.mxu0 0
        %1609 = vmatprep.subr.bf16.mxu0 0
        %1610 = vmatpush1.bf16.msra.mxu0 0
        %1611 = vmatprep.subr.bf16.mxu0 0
        %1612 = vmatpush1.bf16.msra.mxu0 0
        %1613 = vmatprep.subr.bf16.mxu0 0
        %1614 = vmatpush1.bf16.msra.mxu0 0
        %1615 = vmatprep.subr.bf16.mxu0 0
        %1616 = vmatpush1.bf16.msra.mxu0 0
        %1617 = vmatprep.subr.bf16.mxu0 0
        %1618 = vmatpush1.bf16.msra.mxu0 0
        %1619 = vmatprep.subr.bf16.mxu0 0
        %1620 = vmatpush1.bf16.msra.mxu0 0
        %1621 = vmatprep.subr.bf16.mxu0 0
        %1622 = vmatpush1.bf16.msra.mxu0 0
        %1623 = vmatprep.subr.bf16.mxu0 0
        %1624 = vmatpush1.bf16.msra.mxu0 0
        %1625 = vmatprep.subr.bf16.mxu0 0
        %1626 = vmatpush1.bf16.msra.mxu0 0
        %1627 = vmatprep.subr.bf16.mxu0 0
        %1628 = vmatpush1.bf16.msra.mxu0 0
        %1629 = vmatprep.mubr.bf16.mxu0 0
        %1630 = vmatmul.mubr.bf16.gmra.mrb[0].mxu0 %v1589
        %v1631 = vpop.f32.mrb[0].mxu0
        %v1632 = vadd.f32 0.0, %v1631
        %v1633 = vpop.f32.mrb[0].mxu0
        %v1634 = vadd.f32 0.0, %v1633
        %v1635 = vpop.f32.mrb[0].mxu0
        %v1636 = vpop.f32.mrb[0].mxu0
        %1637 = vdwg.mxu0
        %v1638 = vadd.f32 %v1564, %v1632
        %v1639 = vadd.f32 %v1565, %v1634
        %v1640 = vmul.f32 %v1566, %v935
        %v1641 = vmul.f32 %v1567, %v939
        %v1642 = vmul.f32 %v1568, %v937
        %s1643 = scalar_lea.vmem [#allocation12], 24
        %v1644 = vld [vmem:[%s1643] sm:$0xf]
        %v1645 = vpack.c.bf16 %v1640, %v1640
        %v1646 = vpack.c.bf16 %v1641, %v1641
        %v1647 = vpack.c.bf16 %v1642, %v1642
        %1651 = vrot.lane.b32.xlu0 %v1645, 113
        %v1652 = vpop.permute.xlu0 %1651
        %1653 = vrot.lane.b32.xlu0 %v1646, 113
        %v1654 = vpop.permute.xlu0 %1653
        %1655 = vrot.lane.b32.xlu0 %v1647, 113
        %v1656 = vpop.permute.xlu0 %1655
        %v1657 = vsel %vm960, %v1652, %v1654
        %v1658 = vsel %vm960, %v1654, %v1656
        %v1660 = vsel %vm1248, %v1644, 0
        %v1663 = vsel %vm1252, %v1657, 0
        %v1666 = vsel %vm1252, %v1658, 0
        %1668 = vmatprep.subr.bf16.mxu0 %v1666
        %1669 = vmatpush1.bf16.msra.mxu0 %v1663
        %1670 = vmatprep.subr.bf16.mxu0 0
        %1671 = vmatpush1.bf16.msra.mxu0 0
        %1672 = vmatprep.subr.bf16.mxu0 0
        %1673 = vmatpush1.bf16.msra.mxu0 0
        %1674 = vmatprep.subr.bf16.mxu0 0
        %1675 = vmatpush1.bf16.msra.mxu0 0
        %1676 = vmatprep.subr.bf16.mxu0 0
        %1677 = vmatpush1.bf16.msra.mxu0 0
        %1678 = vmatprep.subr.bf16.mxu0 0
        %1679 = vmatpush1.bf16.msra.mxu0 0
        %1680 = vmatprep.subr.bf16.mxu0 0
        %1681 = vmatpush1.bf16.msra.mxu0 0
        %1682 = vmatprep.subr.bf16.mxu0 0
        %1683 = vmatpush1.bf16.msra.mxu0 0
        %1684 = vmatprep.subr.bf16.mxu0 0
        %1685 = vmatpush1.bf16.msra.mxu0 0
        %1686 = vmatprep.subr.bf16.mxu0 0
        %1687 = vmatpush1.bf16.msra.mxu0 0
        %1688 = vmatprep.subr.bf16.mxu0 0
        %1689 = vmatpush1.bf16.msra.mxu0 0
        %1690 = vmatprep.subr.bf16.mxu0 0
        %1691 = vmatpush1.bf16.msra.mxu0 0
        %1692 = vmatprep.subr.bf16.mxu0 0
        %1693 = vmatpush1.bf16.msra.mxu0 0
        %1694 = vmatprep.subr.bf16.mxu0 0
        %1695 = vmatpush1.bf16.msra.mxu0 0
        %1696 = vmatprep.subr.bf16.mxu0 0
        %1697 = vmatpush1.bf16.msra.mxu0 0
        %1698 = vmatprep.subr.bf16.mxu0 0
        %1699 = vmatpush1.bf16.msra.mxu0 0
        %1700 = vmatprep.mubr.bf16.mxu0 0
        %1701 = vmatmul.mubr.bf16.gmra.mrb[0].mxu0 %v1660
        %v1702 = vpop.f32.mrb[0].mxu0
        %v1703 = vadd.f32 0.0, %v1702
        %v1704 = vpop.f32.mrb[0].mxu0
        %v1705 = vadd.f32 0.0, %v1704
        %v1706 = vpop.f32.mrb[0].mxu0
        %v1707 = vpop.f32.mrb[0].mxu0
        %1708 = vdwg.mxu0
        %v1709 = vadd.f32 %v1638, %v1703
        %v1710 = vadd.f32 %v1639, %v1705
        %s1711 = scalar_lea.vmem [#allocation12], 28
        %v1712 = vld [vmem:[%s1711] sm:$0xf]
        %v1713 = vpack.c.bf16 %v1566, %v1566
        %v1714 = vpack.c.bf16 %v1567, %v1567
        %v1715 = vpack.c.bf16 %v1568, %v1568
        %1719 = vrot.lane.b32.xlu0 %v1713, 112
        %v1720 = vpop.permute.xlu0 %1719
        %1721 = vrot.lane.b32.xlu0 %v1714, 112
        %v1722 = vpop.permute.xlu0 %1721
        %1723 = vrot.lane.b32.xlu0 %v1715, 112
        %v1724 = vpop.permute.xlu0 %1723
        %v1725 = vsel %vm1029, %v1720, %v1722
        %v1726 = vsel %vm1029, %v1722, %v1724
        %v1728 = vsel %vm1248, %v1712, 0
        %v1731 = vsel %vm1252, %v1725, 0
        %v1734 = vsel %vm1252, %v1726, 0
        %1736 = vmatprep.subr.bf16.mxu0 %v1734
        %1737 = vmatpush1.bf16.msra.mxu0 %v1731
        %1738 = vmatprep.subr.bf16.mxu0 0
        %1739 = vmatpush1.bf16.msra.mxu0 0
        %1740 = vmatprep.subr.bf16.mxu0 0
        %1741 = vmatpush1.bf16.msra.mxu0 0
        %1742 = vmatprep.subr.bf16.mxu0 0
        %1743 = vmatpush1.bf16.msra.mxu0 0
        %1744 = vmatprep.subr.bf16.mxu0 0
        %1745 = vmatpush1.bf16.msra.mxu0 0
        %1746 = vmatprep.subr.bf16.mxu0 0
        %1747 = vmatpush1.bf16.msra.mxu0 0
        %1748 = vmatprep.subr.bf16.mxu0 0
        %1749 = vmatpush1.bf16.msra.mxu0 0
        %1750 = vmatprep.subr.bf16.mxu0 0
        %1751 = vmatpush1.bf16.msra.mxu0 0
        %1752 = vmatprep.subr.bf16.mxu0 0
        %1753 = vmatpush1.bf16.msra.mxu0 0
        %1754 = vmatprep.subr.bf16.mxu0 0
        %1755 = vmatpush1.bf16.msra.mxu0 0
        %1756 = vmatprep.subr.bf16.mxu0 0
        %1757 = vmatpush1.bf16.msra.mxu0 0
        %1758 = vmatprep.subr.bf16.mxu0 0
        %1759 = vmatpush1.bf16.msra.mxu0 0
        %1760 = vmatprep.subr.bf16.mxu0 0
        %1761 = vmatpush1.bf16.msra.mxu0 0
        %1762 = vmatprep.subr.bf16.mxu0 0
        %1763 = vmatpush1.bf16.msra.mxu0 0
        %1764 = vmatprep.subr.bf16.mxu0 0
        %1765 = vmatpush1.bf16.msra.mxu0 0
        %1766 = vmatprep.subr.bf16.mxu0 0
        %1767 = vmatpush1.bf16.msra.mxu0 0
        %1768 = vmatprep.mubr.bf16.mxu0 0
        %1769 = vmatmul.mubr.bf16.gmra.mrb[0].mxu0 %v1728
        %v1770 = vpop.f32.mrb[0].mxu0
        %v1771 = vadd.f32 0.0, %v1770
        %v1772 = vpop.f32.mrb[0].mxu0
        %v1773 = vadd.f32 0.0, %v1772
        %v1774 = vpop.f32.mrb[0].mxu0
        %v1775 = vpop.f32.mrb[0].mxu0
        %1776 = vdwg.mxu0
        %v1777 = vadd.f32 %v1709, %v1771
        %v1778 = vadd.f32 %v1710, %v1773
        %v1779 = vmul.f32 %v1566, %v1085
        %v1780 = vmul.f32 %v1567, %v1089
        %v1781 = vmul.f32 %v1568, %v1087
        %s1782 = scalar_lea.vmem [#allocation12], 32
        %v1783 = vld [vmem:[%s1782] sm:$0xf]
        %v1784 = vpack.c.bf16 %v1779, %v1779
        %v1785 = vpack.c.bf16 %v1780, %v1780
        %v1786 = vpack.c.bf16 %v1781, %v1781
        %1790 = vrot.lane.b32.xlu0 %v1784, 111
        %v1791 = vpop.permute.xlu0 %1790
        %1792 = vrot.lane.b32.xlu0 %v1785, 111
        %v1793 = vpop.permute.xlu0 %1792
        %1794 = vrot.lane.b32.xlu0 %v1786, 111
        %v1795 = vpop.permute.xlu0 %1794
        %v1796 = vsel %vm1110, %v1791, %v1793
        %v1797 = vsel %vm1110, %v1793, %v1795
        %v1799 = vsel %vm1248, %v1783, 0
        %v1802 = vsel %vm1252, %v1796, 0
        %v1805 = vsel %vm1252, %v1797, 0
        %1807 = vmatprep.subr.bf16.mxu0 %v1805
        %1808 = vmatpush1.bf16.msra.mxu0 %v1802
        %1809 = vmatprep.subr.bf16.mxu0 0
        %1810 = vmatpush1.bf16.msra.mxu0 0
        %1811 = vmatprep.subr.bf16.mxu0 0
        %1812 = vmatpush1.bf16.msra.mxu0 0
        %1813 = vmatprep.subr.bf16.mxu0 0
        %1814 = vmatpush1.bf16.msra.mxu0 0
        %1815 = vmatprep.subr.bf16.mxu0 0
        %1816 = vmatpush1.bf16.msra.mxu0 0
        %1817 = vmatprep.subr.bf16.mxu0 0
        %1818 = vmatpush1.bf16.msra.mxu0 0
        %1819 = vmatprep.subr.bf16.mxu0 0
        %1820 = vmatpush1.bf16.msra.mxu0 0
        %1821 = vmatprep.subr.bf16.mxu0 0
        %1822 = vmatpush1.bf16.msra.mxu0 0
        %1823 = vmatprep.subr.bf16.mxu0 0
        %1824 = vmatpush1.bf16.msra.mxu0 0
        %1825 = vmatprep.subr.bf16.mxu0 0
        %1826 = vmatpush1.bf16.msra.mxu0 0
        %1827 = vmatprep.subr.bf16.mxu0 0
        %1828 = vmatpush1.bf16.msra.mxu0 0
        %1829 = vmatprep.subr.bf16.mxu0 0
        %1830 = vmatpush1.bf16.msra.mxu0 0
        %1831 = vmatprep.subr.bf16.mxu0 0
        %1832 = vmatpush1.bf16.msra.mxu0 0
        %1833 = vmatprep.subr.bf16.mxu0 0
        %1834 = vmatpush1.bf16.msra.mxu0 0
        %1835 = vmatprep.subr.bf16.mxu0 0
        %1836 = vmatpush1.bf16.msra.mxu0 0
        %1837 = vmatprep.subr.bf16.mxu0 0
        %1838 = vmatpush1.bf16.msra.mxu0 0
        %1839 = vmatprep.mubr.bf16.mxu0 0
        %1840 = vmatmul.mubr.bf16.gmra.mrb[0].mxu0 %v1799
        %v1841 = vpop.f32.mrb[0].mxu0
        %v1842 = vadd.f32 0.0, %v1841
        %v1843 = vpop.f32.mrb[0].mxu0
        %v1844 = vadd.f32 0.0, %v1843
        %v1845 = vpop.f32.mrb[0].mxu0
        %v1846 = vpop.f32.mrb[0].mxu0
        %1847 = vdwg.mxu0
        %v1848 = vadd.f32 %v1777, %v1842
        %v1849 = vadd.f32 %v1778, %v1844
        %v1850 = vmul.f32 %v1848, 0.2
        %v1851 = vmul.f32 %v1849, 0.2
        %v1852 = vmax.f32 %v1848, %v1850
        %v1853 = vmax.f32 %v1849, %v1851
        %v1854 = vadd.f32 %v1852, %v1853
        %1855 = vadd.xlane.f32.xlu0 %v1854
        %v1856 = vpop.xlane.xlu0 %1855
        %v1857 = vmul.f32 %v1856, %v1172
        %v1858 = vmul.f32 %v1852, %v1852
        %v1859 = vmul.f32 %v1853, %v1853
        %v1860 = vadd.f32 %v1858, %v1859
        %1861 = vadd.xlane.f32.xlu0 %v1860
        %v1862 = vpop.xlane.xlu0 %1861
        %v1863 = vmul.f32 %v1862, %v1172
        %v1864 = vmul.f32 %v1857, %v1857
        %v1865 = vsub.f32 %v1863, %v1864
        %v1866 = vmax.f32 %v1865, 0.0
        %v1867 = vsub.f32 %v1852, %v1857
        %v1868 = vsub.f32 %v1853, %v1857
        %v1869 = vadd.f32 %v1866, 1e-05
        %v1870 = vrsqrt.pop %v1869
        %v1871 = vmul.f32 %v1867, %v1870
        %v1872 = vmul.f32 %v1868, %v1870
        %1873 = vset.pattern.permute.xlu0 2
        %1874 = vperm.xlu0 %1873, %v428
        %v1875 = vpop.permute.xlu0 %1874
        %v1877 = vmul.f32 %v1875, %v1871
        %v1878 = vmul.f32 %v1875, %v1872
        %1879 = vset.pattern.permute.xlu0 3
        %1880 = vperm.xlu0 %1879, %v428
        %v1881 = vpop.permute.xlu0 %1880
        %v1883 = vadd.f32 %v1877, %v1881
        %v1884 = vadd.f32 %v1878, %v1881
        %1885 = vst [vmem:[%s420] sm:$0xff] %v1883
        %1886 = vst [vmem:[%s420 + $0x8] sm:$0xff] %v1884
        %s1887 = sand.u32 %s199, 1
        %s1888 = scalar_lea.sflag [#allocation5], %s1887
        %s1889 = sand.u32 %s199, 1
        %s1890 = smul.addr %s1889, 16
        %s1891 = scalar_lea.vmem [#allocation15], %s1890
        // Predicated region
        $region77: #{genblock_forward.1} parent=47 // pred_check
          %p1892 = pneg %p209
        $region78: #{genblock_forward.1} parent=47 // pred_check_branch
          %1894 = sbr.rel (%p1892) target = $region80
        $region79: #{genblock_forward.1} parent=47 // pred_region
          %s1896 = ssub.s32 256, 256
          %1897 = vsyncadd %s1888, %s1896
          %s1898 = smul.addr %s29, 2
          %s1899 = smul.addr %s1898, 128
          %s1900 = scalar_lea.hbm %s7, %s1899
          %s1902 = sshll.u32 %s1891, 4
          %s1903 = int_to_ptr.vmem [resolvable:$true] %s1902
          %1905 = dma.vmem_to_hbm [thread:$0]  %s1903, 256, %s1900, %s1888
        $region80: #{genblock_forward.1} parent=47 // pred_fallthru
          _
      $region48: #{genblock_forward.1} parent=5 // pred_fallthru
        _
      %p1906 = scmp.le.s32.totalorder 2, %s24
      // Predicated region
      $region81: #{genblock_forward.1} parent=5 // pred_check
        %p1907 = pneg %p1906
      $region82: #{genblock_forward.1} parent=5 // pred_check_branch
        %1909 = sbr.rel (%p1907) target = $region84
      $region83: #{genblock_forward.1} parent=5 // pred_region
        %s1910 = ssub.s32 %s24, 2
        // Predicated region
        $region85: #{genblock_forward.1} parent=83 // pred_check
          %p1911 = pneg %p215
        $region86: #{genblock_forward.1} parent=83 // pred_check_branch
          %1913 = sbr.rel (%p1911) target = $region88
        $region87: #{genblock_forward.1} parent=83 // pred_region
          %s1914 = sand.u32 %s200, 1
          %s1915 = scalar_lea.sflag [#allocation5], %s1914
          %s1916 = sand.u32 %s200, 1
          %s1917 = smul.addr %s1916, 16
          %s1918 = scalar_lea.vmem [#allocation15], %s1917
          %1919 = dma.done %s1915, 256
        $region88: #{genblock_forward.1} parent=83 // pred_fallthru
          _
      $region84: #{genblock_forward.1} parent=5 // pred_fallthru
        _
    $region6: #{genblock_forward.1} parent=1 // loop_footer
      %s28 = sadd.s32 1, %s24
    $region7: #{genblock_forward.1} parent=1 // loop_footer_branch
      %23 = sbr.rel target = $region3
    $region8: #{genblock_forward.1} parent=1 // loop_exit
      _
    %1920 = vsyncpa [#allocation4], 1
    %s1921 = scalar_lea.sflag [#allocation4], 1
    %1922 = vsyncpa %s1921, 1
    %1923 = vsyncpa [#allocation7], 1
    %s1924 = scalar_lea.sflag [#allocation7], 1
    %1925 = vsyncpa %s1924, 1
    %1926 = vsyncpa [#allocation10], 1
    %1927 = vsyncpa [#allocation13], 1
    %1928 = vsyncpa [#allocation5], 1
    %s1929 = scalar_lea.sflag [#allocation5], 1
    %1930 = vsyncpa %s1929, 1

</llo_original>
